<compile_context>
chip_gen: v6e
topology: v6e:2x2x1
jax: 0.10.0
libtpu: 0.0.40
codegen_flags: <defaults>
</compile_context>

<pallas_src>
import functools

import jax
import jax.numpy as jnp
from jax import lax
from jax.experimental import pallas as pl
from jax.experimental.pallas import tpu as pltpu


# ----------------------------- in-kernel LSTM cell ---------------------------

def _lstm_cell(gates, c_prev, h_dim):
    """Dense-packed LSTM gate math, PyTorch gate order (i, f, g, o). All f32."""
    i = jax.nn.sigmoid(gates[:, 0 * h_dim:1 * h_dim])
    f = jax.nn.sigmoid(gates[:, 1 * h_dim:2 * h_dim])
    g = jnp.tanh(gates[:, 2 * h_dim:3 * h_dim])
    o = jax.nn.sigmoid(gates[:, 3 * h_dim:4 * h_dim])
    c = f * c_prev + i * g
    h = o * jnp.tanh(c)
    return h, c


# ----------------------------- Pallas kernel ---------------------------------

def _make_encoder_kernel(seq_len, batch_pad, h1_dim, h2_dim, unroll):
    T, Bp, H1, H2 = seq_len, batch_pad, h1_dim, h2_dim

    def kernel(x_ref, wih1_ref, whh1_ref, b1_ref,
               wih2_ref, whh2_ref, b2_ref,
               out_ref, xp_sc):
        """Fused 2-layer LSTM encoder.

        x_ref   : (T*Bp, Fp)   bf16  time-major input, flattened over (t, batch)
        wih1_ref: (Fp, 4*H1)   bf16  layer-1 input->gate weights (dense gate packing)
        whh1_ref: (H1, 4*H1)   bf16  layer-1 hidden->gate weights
        b1_ref  : (1, 4*H1)    f32   layer-1 b_ih + b_hh
        wih2_ref: (H1, 4*H2)   bf16  layer-2 input->gate weights
        whh2_ref: (H2, 4*H2)   bf16  layer-2 hidden->gate weights
        b2_ref  : (1, 4*H2)    f32   layer-2 b_ih + b_hh
        out_ref : (Bp, H2)     f32   final layer-2 hidden state
        xp_sc   : (T*Bp, 4*H1) f32   hoisted layer-1 input projections
        """
        # ---- layer-1 input projection for the whole sequence (one MXU matmul) ----
        xp_sc[...] = jnp.dot(x_ref[...], wih1_ref[...],
                             preferred_element_type=jnp.float32) + b1_ref[...]

        whh1 = whh1_ref[...]
        wih2 = wih2_ref[...]
        whh2 = whh2_ref[...]
        b2 = b2_ref[...]

        def layer2_xp(h1_t):
            # Layer-2 input contribution; consumed one iteration later.
            return jnp.dot(h1_t.astype(jnp.bfloat16), wih2,
                           preferred_element_type=jnp.float32) + b2

        # ---- prologue: layer-1 step 0 (zero init state => gates = xp1[0]) ----
        h1_t, c1_t = _lstm_cell(xp_sc[pl.ds(0, Bp), :],
                                jnp.zeros((Bp, H1), jnp.float32), H1)
        carry0 = (h1_t, c1_t,
                  jnp.zeros((Bp, H2), jnp.float32),     # h2_{-1}
                  jnp.zeros((Bp, H2), jnp.float32),     # c2_{-1}
                  layer2_xp(h1_t))                      # xp2_0

        # ---- interleaved recurrences: layer 2 runs one timestep behind layer 1 ----
        def step(t, carry):
            h1_prev, c1_prev, h2_prev, c2_prev, xp2_prev = carry
            row = pl.multiple_of(t * Bp, Bp)

            # chain A: layer-1 step t
            g1 = xp_sc[pl.ds(row, Bp), :] + jnp.dot(
                h1_prev.astype(jnp.bfloat16), whh1,
                preferred_element_type=jnp.float32)
            h1_new, c1_new = _lstm_cell(g1, c1_prev, H1)

            # chain B: layer-2 step t-1 (independent of chain A this iteration)
            g2 = xp2_prev + jnp.dot(h2_prev.astype(jnp.bfloat16), whh2,
                                    preferred_element_type=jnp.float32)
            h2_new, c2_new = _lstm_cell(g2, c2_prev, H2)

            # layer-2 input contribution for the next iteration (off the serial path)
            xp2_new = layer2_xp(h1_new)
            return h1_new, c1_new, h2_new, c2_new, xp2_new

        _, _, h2_prev, c2_prev, xp2_prev = lax.fori_loop(
            1, T, step, carry0, unroll=unroll)

        # ---- epilogue: layer-2 step T-1; only the final hidden state is needed ----
        g2 = xp2_prev + jnp.dot(h2_prev.astype(jnp.bfloat16), whh2,
                                preferred_element_type=jnp.float32)
        h2_last, _ = _lstm_cell(g2, c2_prev, H2)
        out_ref[...] = h2_last

    return kernel


def _encoder_pallas(x_flat, wih1, whh1, b1, wih2, whh2, b2,
                    *, seq_len, batch_pad, h1_dim, h2_dim):
    # Full unroll only for small T; modest unroll keeps instruction memory and vreg
    # live ranges sane for long sequences while still giving cross-step overlap.
    unroll = True if seq_len <= 16 else 8
    kernel = _make_encoder_kernel(seq_len, batch_pad, h1_dim, h2_dim, unroll)
    vmem = pl.BlockSpec(memory_space=pltpu.MemorySpace.VMEM)
    return pl.pallas_call(
        kernel,
        out_shape=jax.ShapeDtypeStruct((batch_pad, h2_dim), jnp.float32),
        in_specs=[vmem] * 7,
        out_specs=vmem,
        scratch_shapes=[
            pltpu.VMEM((seq_len * batch_pad, 4 * h1_dim), jnp.float32),
        ],
    )(x_flat, wih1, whh1, b1, wih2, whh2, b2)


# --------------------------- parameter preparation ---------------------------

def _prep_lstm(w_ih, w_hh, b_ih, b_hh, in_rows=None):
    """PyTorch-layout LSTM params -> dense-gate-packed, transposed, bf16 weights.

    w_ih: (4H, in_dim), w_hh: (4H, H), biases: (4H,).  After transposing, gate g
    occupies columns [g*H, (g+1)*H) (PyTorch order i, f, g, o).  Padded input rows
    are zero so padded feature lanes never contribute.
    """
    H4, in_dim = w_ih.shape
    H = H4 // 4
    if in_rows is None:
        in_rows = in_dim
    wih = jnp.zeros((in_rows, 4 * H), jnp.float32)
    wih = wih.at[:in_dim, :].set(w_ih.T.astype(jnp.float32))
    whh = w_hh.T.astype(jnp.float32)
    b = (b_ih + b_hh).astype(jnp.float32).reshape(1, 4 * H)
    return wih.astype(jnp.bfloat16), whh.astype(jnp.bfloat16), b


def prepare_encoder_params(params, n_features):
    """Host-side weight prep.  Call ONCE at init (not per forward call)."""
    f_pad = ((max(n_features, 8) + 7) // 8) * 8
    wih1, whh1, b1 = _prep_lstm(*params["rnn1"], in_rows=f_pad)
    wih2, whh2, b2 = _prep_lstm(*params["rnn2"])
    return {"wih1": wih1, "whh1": whh1, "b1": b1,
            "wih2": wih2, "whh2": whh2, "b2": b2}


# ------------------------------ Encoder ---------------------------------------

def init_encoder_params(key, seq_len, n_features, embedding_dim):
    """Deterministic init mimicking PyTorch's U(-1/sqrt(H), 1/sqrt(H))."""
    hidden_dim = 2 * embedding_dim

    def lstm_params(key, in_dim, hid):
        k = 1.0 / jnp.sqrt(jnp.float32(hid))
        ks = jax.random.split(key, 4)
        w_ih = jax.random.uniform(ks[0], (4 * hid, in_dim), jnp.float32, -k, k)
        w_hh = jax.random.uniform(ks[1], (4 * hid, hid), jnp.float32, -k, k)
        b_ih = jax.random.uniform(ks[2], (4 * hid,), jnp.float32, -k, k)
        b_hh = jax.random.uniform(ks[3], (4 * hid,), jnp.float32, -k, k)
        return (w_ih, w_hh, b_ih, b_hh)

    k1, k2 = jax.random.split(key)
    return {
        "rnn1": lstm_params(k1, n_features, hidden_dim),
        "rnn2": lstm_params(k2, hidden_dim, embedding_dim),
    }


@functools.partial(jax.jit, static_argnames=("seq_len", "n_features"))
def encoder_forward(x, prepped, *, seq_len, n_features):
    batch = x.shape[0]
    x = x.reshape((batch, seq_len, n_features)).astype(jnp.float32)

    f_pad = prepped["wih1"].shape[0]       # static under jit
    h1_dim = prepped["whh1"].shape[0]      # = 2 * embedding_dim
    h2_dim = prepped["whh2"].shape[0]      # = embedding_dim
    b_pad = ((batch + 7) // 8) * 8         # pad batch to f32 sublane multiple

    x_tm = jnp.transpose(x, (1, 0, 2))     # (T, B, F) time-major
    x_tm = jnp.pad(x_tm, ((0, 0), (0, b_pad - batch), (0, f_pad - n_features)))
    x_flat = x_tm.reshape(seq_len * b_pad, f_pad).astype(jnp.bfloat16)

    out_pad = _encoder_pallas(
        x_flat, prepped["wih1"], prepped["whh1"], prepped["b1"],
        prepped["wih2"], prepped["whh2"], prepped["b2"],
        seq_len=seq_len, batch_pad=b_pad, h1_dim=h1_dim, h2_dim=h2_dim)
    # hidden_n of a single-layer, unidirectional LSTM == last timestep output.
    return out_pad[:batch]


# --------------------------- pure-JAX reference -------------------------------

def _lstm_ref(x_tm, w_ih, w_hh, b_ih, b_hh):
    T, B, _ = x_tm.shape
    H = w_hh.shape[1]
    b = (b_ih + b_hh)[None, :]

    def step(carry, x_t):
        h, c = carry
        gates = x_t @ w_ih.T + h @ w_hh.T + b
        i = jax.nn.sigmoid(gates[:, 0 * H:1 * H])
        f = jax.nn.sigmoid(gates[:, 1 * H:2 * H])
        g = jnp.tanh(gates[:, 2 * H:3 * H])
        o = jax.nn.sigmoid(gates[:, 3 * H:4 * H])
        c = f * c + i * g
        h = o * jnp.tanh(c)
        return (h, c), h

    init = (jnp.zeros((B, H), jnp.float32), jnp.zeros((B, H), jnp.float32))
    _, hs = lax.scan(step, init, x_tm)
    return hs


def encoder_ref(x, params, seq_len, n_features, embedding_dim):
    B = x.shape[0]
    x_tm = jnp.transpose(x.reshape(B, seq_len, n_features), (1, 0, 2))
    h1 = _lstm_ref(x_tm, *params["rnn1"])
    h2 = _lstm_ref(h1, *params["rnn2"])
    return h2[-1].reshape(B, embedding_dim)


# ------------------------------- main -----------------------------------------

if __name__ == "__main__":
    SEQ_LEN = 8
    N_FEATURES = 4
    EMBEDDING_DIM = 32
    BATCH = 2

    key = jax.random.PRNGKey(0)
    k_param, k_x = jax.random.split(key)

    params = init_encoder_params(k_param, SEQ_LEN, N_FEATURES, EMBEDDING_DIM)
    prepped = prepare_encoder_params(params, N_FEATURES)   # once at init
    x = jax.random.normal(k_x, (BATCH, SEQ_LEN, N_FEATURES), dtype=jnp.float32)

    out = encoder_forward(x, prepped, seq_len=SEQ_LEN, n_features=N_FEATURES)
    out = jax.block_until_ready(out)
    assert out.shape == (BATCH, EMBEDDING_DIM), out.shape

    ref = jax.block_until_ready(
        encoder_ref(x, params, SEQ_LEN, N_FEATURES, EMBEDDING_DIM))
    # bf16 MXU operands (f32 accumulation) -> loosened tolerance vs. pure-f32 reference.
    max_err = float(jnp.max(jnp.abs(out - ref)))
    assert jnp.allclose(out, ref, rtol=5e-2, atol=5e-2), max_err

    print("KERNEL_OK")
</pallas_src>

<mosaic_0001>
module attributes {stable_mosaic.version = 11 : i64} {
  func.func @kernel(%arg0: memref<64x8xbf16, #tpu.memory_space<vmem>>, %arg1: memref<8x256xbf16, #tpu.memory_space<vmem>>, %arg2: memref<64x256xbf16, #tpu.memory_space<vmem>>, %arg3: memref<1x256xf32, #tpu.memory_space<vmem>>, %arg4: memref<64x128xbf16, #tpu.memory_space<vmem>>, %arg5: memref<32x128xbf16, #tpu.memory_space<vmem>>, %arg6: memref<1x128xf32, #tpu.memory_space<vmem>>, %arg7: memref<8x32xf32, #tpu.memory_space<vmem>>, %arg8: memref<64x256xf32, #tpu.memory_space<vmem>>) attributes {dimension_semantics = [], scalar_prefetch = 0 : i64, scratch_operands = 1 : i64, tpu.core_type = #tpu.core_type<tc>} {
    %c0 = arith.constant 0 : index
    %c0_0 = arith.constant 0 : index
    %0 = vector.load %arg0[%c0, %c0_0] : memref<64x8xbf16, #tpu.memory_space<vmem>>, vector<64x8xbf16>
    %c0_1 = arith.constant 0 : index
    %c0_2 = arith.constant 0 : index
    %1 = vector.load %arg1[%c0_1, %c0_2] : memref<8x256xbf16, #tpu.memory_space<vmem>>, vector<8x256xbf16>
    %cst = arith.constant dense<0.000000e+00> : vector<64x256xf32>
    %2 = tpu.matmul %0, %1, %cst {dimension_numbers = #tpu.dot_dimension_numbers<[1], [0], [0], [1], [0, 0, 1, 1], [], []>} : vector<64x8xbf16>, vector<8x256xbf16>, vector<64x256xf32> -> vector<64x256xf32>
    %c0_3 = arith.constant 0 : index
    %c0_4 = arith.constant 0 : index
    %3 = vector.load %arg3[%c0_3, %c0_4] : memref<1x256xf32, #tpu.memory_space<vmem>>, vector<1x256xf32>
    %4 = vector.broadcast %3 : vector<1x256xf32> to vector<64x256xf32>
    %5 = arith.addf %2, %4 : vector<64x256xf32>
    %c0_5 = arith.constant 0 : index
    %c0_6 = arith.constant 0 : index
    %6 = vector.load %arg8[%c0_5, %c0_6] : memref<64x256xf32, #tpu.memory_space<vmem>>, vector<64x256xf32>
    tpu.vector_store %arg8[%c0_5, %c0_6], %5 {strides = array<i32>} : memref<64x256xf32, #tpu.memory_space<vmem>>, vector<64x256xf32>,
    %c0_7 = arith.constant 0 : index
    %c0_8 = arith.constant 0 : index
    %7 = vector.load %arg2[%c0_7, %c0_8] : memref<64x256xbf16, #tpu.memory_space<vmem>>, vector<64x256xbf16>
    %c0_9 = arith.constant 0 : index
    %c0_10 = arith.constant 0 : index
    %8 = vector.load %arg4[%c0_9, %c0_10] : memref<64x128xbf16, #tpu.memory_space<vmem>>, vector<64x128xbf16>
    %c0_11 = arith.constant 0 : index
    %c0_12 = arith.constant 0 : index
    %9 = vector.load %arg5[%c0_11, %c0_12] : memref<32x128xbf16, #tpu.memory_space<vmem>>, vector<32x128xbf16>
    %c0_13 = arith.constant 0 : index
    %c0_14 = arith.constant 0 : index
    %10 = vector.load %arg6[%c0_13, %c0_14] : memref<1x128xf32, #tpu.memory_space<vmem>>, vector<1x128xf32>
    %c0_15 = arith.constant 0 : index
    %c0_16 = arith.constant 0 : index
    %11 = vector.load %arg8[%c0_15, %c0_16] : memref<64x256xf32, #tpu.memory_space<vmem>>, vector<8x256xf32>
    %cst_17 = arith.constant 0.000000e+00 : f32
    %12 = vector.broadcast %cst_17 : f32 to vector<8x64xf32>
    %13 = vector.extract_strided_slice %11 {offsets = [0, 0], sizes = [8, 64], strides = [1, 1]} : vector<8x256xf32> to vector<8x64xf32>
    %14 = arith.negf %13 : vector<8x64xf32>
    %15 = math.exp %14 : vector<8x64xf32>
    %cst_18 = arith.constant 1.000000e+00 : f32
    %16 = vector.broadcast %cst_18 : f32 to vector<8x64xf32>
    %17 = arith.addf %16, %15 : vector<8x64xf32>
    %18 = arith.divf %16, %17 : vector<8x64xf32>
    %19 = vector.extract_strided_slice %11 {offsets = [0, 64], sizes = [8, 64], strides = [1, 1]} : vector<8x256xf32> to vector<8x64xf32>
    %20 = arith.negf %19 : vector<8x64xf32>
    %21 = math.exp %20 : vector<8x64xf32>
    %cst_19 = arith.constant 1.000000e+00 : f32
    %22 = vector.broadcast %cst_19 : f32 to vector<8x64xf32>
    %23 = arith.addf %22, %21 : vector<8x64xf32>
    %24 = arith.divf %22, %23 : vector<8x64xf32>
    %25 = vector.extract_strided_slice %11 {offsets = [0, 128], sizes = [8, 64], strides = [1, 1]} : vector<8x256xf32> to vector<8x64xf32>
    %26 = math.tanh %25 : vector<8x64xf32>
    %27 = vector.extract_strided_slice %11 {offsets = [0, 192], sizes = [8, 64], strides = [1, 1]} : vector<8x256xf32> to vector<8x64xf32>
    %28 = arith.negf %27 : vector<8x64xf32>
    %29 = math.exp %28 : vector<8x64xf32>
    %cst_20 = arith.constant 1.000000e+00 : f32
    %30 = vector.broadcast %cst_20 : f32 to vector<8x64xf32>
    %31 = arith.addf %30, %29 : vector<8x64xf32>
    %32 = arith.divf %30, %31 : vector<8x64xf32>
    %33 = arith.mulf %24, %12 : vector<8x64xf32>
    %34 = arith.mulf %18, %26 : vector<8x64xf32>
    %35 = arith.addf %33, %34 : vector<8x64xf32>
    %36 = math.tanh %35 : vector<8x64xf32>
    %37 = arith.mulf %32, %36 : vector<8x64xf32>
    %cst_21 = arith.constant 0.000000e+00 : f32
    %38 = vector.broadcast %cst_21 : f32 to vector<8x32xf32>
    %cst_22 = arith.constant 0.000000e+00 : f32
    %39 = vector.broadcast %cst_22 : f32 to vector<8x32xf32>
    %40 = arith.truncf %37 : vector<8x64xf32> to vector<8x64xbf16>
    %cst_23 = arith.constant dense<0.000000e+00> : vector<8x128xf32>
    %41 = tpu.matmul %40, %8, %cst_23 {dimension_numbers = #tpu.dot_dimension_numbers<[1], [0], [0], [1], [0, 0, 1, 1], [], []>} : vector<8x64xbf16>, vector<64x128xbf16>, vector<8x128xf32> -> vector<8x128xf32>
    %42 = vector.broadcast %10 : vector<1x128xf32> to vector<8x128xf32>
    %43 = arith.addf %41, %42 : vector<8x128xf32>
    %c1_i32 = arith.constant 1 : i32
    %c8_i32 = arith.constant 8 : i32
    %44 = arith.muli %c1_i32, %c8_i32 : i32
    %45 = tpu.assume_multiple %44, 8 : i32
    %46 = arith.index_cast %45 : i32 to index
    %c0_24 = arith.constant 0 : index
    %47 = vector.load %arg8[%46, %c0_24] : memref<64x256xf32, #tpu.memory_space<vmem>>, vector<8x256xf32>
    %48 = arith.truncf %37 : vector<8x64xf32> to vector<8x64xbf16>
    %cst_25 = arith.constant dense<0.000000e+00> : vector<8x256xf32>
    %49 = tpu.matmul %48, %7, %cst_25 {dimension_numbers = #tpu.dot_dimension_numbers<[1], [0], [0], [1], [0, 0, 1, 1], [], []>} : vector<8x64xbf16>, vector<64x256xbf16>, vector<8x256xf32> -> vector<8x256xf32>
    %50 = arith.addf %47, %49 : vector<8x256xf32>
    %51 = vector.extract_strided_slice %50 {offsets = [0, 0], sizes = [8, 64], strides = [1, 1]} : vector<8x256xf32> to vector<8x64xf32>
    %52 = arith.negf %51 : vector<8x64xf32>
    %53 = math.exp %52 : vector<8x64xf32>
    %cst_26 = arith.constant 1.000000e+00 : f32
    %54 = vector.broadcast %cst_26 : f32 to vector<8x64xf32>
    %55 = arith.addf %54, %53 : vector<8x64xf32>
    %56 = arith.divf %54, %55 : vector<8x64xf32>
    %57 = vector.extract_strided_slice %50 {offsets = [0, 64], sizes = [8, 64], strides = [1, 1]} : vector<8x256xf32> to vector<8x64xf32>
    %58 = arith.negf %57 : vector<8x64xf32>
    %59 = math.exp %58 : vector<8x64xf32>
    %cst_27 = arith.constant 1.000000e+00 : f32
    %60 = vector.broadcast %cst_27 : f32 to vector<8x64xf32>
    %61 = arith.addf %60, %59 : vector<8x64xf32>
    %62 = arith.divf %60, %61 : vector<8x64xf32>
    %63 = vector.extract_strided_slice %50 {offsets = [0, 128], sizes = [8, 64], strides = [1, 1]} : vector<8x256xf32> to vector<8x64xf32>
    %64 = math.tanh %63 : vector<8x64xf32>
    %65 = vector.extract_strided_slice %50 {offsets = [0, 192], sizes = [8, 64], strides = [1, 1]} : vector<8x256xf32> to vector<8x64xf32>
    %66 = arith.negf %65 : vector<8x64xf32>
    %67 = math.exp %66 : vector<8x64xf32>
    %cst_28 = arith.constant 1.000000e+00 : f32
    %68 = vector.broadcast %cst_28 : f32 to vector<8x64xf32>
    %69 = arith.addf %68, %67 : vector<8x64xf32>
    %70 = arith.divf %68, %69 : vector<8x64xf32>
    %71 = arith.mulf %62, %35 : vector<8x64xf32>
    %72 = arith.mulf %56, %64 : vector<8x64xf32>
    %73 = arith.addf %71, %72 : vector<8x64xf32>
    %74 = math.tanh %73 : vector<8x64xf32>
    %75 = arith.mulf %70, %74 : vector<8x64xf32>
    %76 = arith.truncf %38 : vector<8x32xf32> to vector<8x32xbf16>
    %cst_29 = arith.constant dense<0.000000e+00> : vector<8x128xf32>
    %77 = tpu.matmul %76, %9, %cst_29 {dimension_numbers = #tpu.dot_dimension_numbers<[1], [0], [0], [1], [0, 0, 1, 1], [], []>} : vector<8x32xbf16>, vector<32x128xbf16>, vector<8x128xf32> -> vector<8x128xf32>
    %78 = arith.addf %43, %77 : vector<8x128xf32>
    %79 = vector.extract_strided_slice %78 {offsets = [0, 0], sizes = [8, 32], strides = [1, 1]} : vector<8x128xf32> to vector<8x32xf32>
    %80 = arith.negf %79 : vector<8x32xf32>
    %81 = math.exp %80 : vector<8x32xf32>
    %cst_30 = arith.constant 1.000000e+00 : f32
    %82 = vector.broadcast %cst_30 : f32 to vector<8x32xf32>
    %83 = arith.addf %82, %81 : vector<8x32xf32>
    %84 = arith.divf %82, %83 : vector<8x32xf32>
    %85 = vector.extract_strided_slice %78 {offsets = [0, 32], sizes = [8, 32], strides = [1, 1]} : vector<8x128xf32> to vector<8x32xf32>
    %86 = arith.negf %85 : vector<8x32xf32>
    %87 = math.exp %86 : vector<8x32xf32>
    %cst_31 = arith.constant 1.000000e+00 : f32
    %88 = vector.broadcast %cst_31 : f32 to vector<8x32xf32>
    %89 = arith.addf %88, %87 : vector<8x32xf32>
    %90 = arith.divf %88, %89 : vector<8x32xf32>
    %91 = vector.extract_strided_slice %78 {offsets = [0, 64], sizes = [8, 32], strides = [1, 1]} : vector<8x128xf32> to vector<8x32xf32>
    %92 = math.tanh %91 : vector<8x32xf32>
    %93 = vector.extract_strided_slice %78 {offsets = [0, 96], sizes = [8, 32], strides = [1, 1]} : vector<8x128xf32> to vector<8x32xf32>
    %94 = arith.negf %93 : vector<8x32xf32>
    %95 = math.exp %94 : vector<8x32xf32>
    %cst_32 = arith.constant 1.000000e+00 : f32
    %96 = vector.broadcast %cst_32 : f32 to vector<8x32xf32>
    %97 = arith.addf %96, %95 : vector<8x32xf32>
    %98 = arith.divf %96, %97 : vector<8x32xf32>
    %99 = arith.mulf %90, %39 : vector<8x32xf32>
    %100 = arith.mulf %84, %92 : vector<8x32xf32>
    %101 = arith.addf %99, %100 : vector<8x32xf32>
    %102 = math.tanh %101 : vector<8x32xf32>
    %103 = arith.mulf %98, %102 : vector<8x32xf32>
    %104 = arith.truncf %75 : vector<8x64xf32> to vector<8x64xbf16>
    %cst_33 = arith.constant dense<0.000000e+00> : vector<8x128xf32>
    %105 = tpu.matmul %104, %8, %cst_33 {dimension_numbers = #tpu.dot_dimension_numbers<[1], [0], [0], [1], [0, 0, 1, 1], [], []>} : vector<8x64xbf16>, vector<64x128xbf16>, vector<8x128xf32> -> vector<8x128xf32>
    %106 = vector.broadcast %10 : vector<1x128xf32> to vector<8x128xf32>
    %107 = arith.addf %105, %106 : vector<8x128xf32>
    %c2_i32 = arith.constant 2 : i32
    %c8_i32_34 = arith.constant 8 : i32
    %108 = arith.muli %c2_i32, %c8_i32_34 : i32
    %109 = tpu.assume_multiple %108, 8 : i32
    %110 = arith.index_cast %109 : i32 to index
    %c0_35 = arith.constant 0 : index
    %111 = vector.load %arg8[%110, %c0_35] : memref<64x256xf32, #tpu.memory_space<vmem>>, vector<8x256xf32>
    %112 = arith.truncf %75 : vector<8x64xf32> to vector<8x64xbf16>
    %cst_36 = arith.constant dense<0.000000e+00> : vector<8x256xf32>
    %113 = tpu.matmul %112, %7, %cst_36 {dimension_numbers = #tpu.dot_dimension_numbers<[1], [0], [0], [1], [0, 0, 1, 1], [], []>} : vector<8x64xbf16>, vector<64x256xbf16>, vector<8x256xf32> -> vector<8x256xf32>
    %114 = arith.addf %111, %113 : vector<8x256xf32>
    %115 = vector.extract_strided_slice %114 {offsets = [0, 0], sizes = [8, 64], strides = [1, 1]} : vector<8x256xf32> to vector<8x64xf32>
    %116 = arith.negf %115 : vector<8x64xf32>
    %117 = math.exp %116 : vector<8x64xf32>
    %cst_37 = arith.constant 1.000000e+00 : f32
    %118 = vector.broadcast %cst_37 : f32 to vector<8x64xf32>
    %119 = arith.addf %118, %117 : vector<8x64xf32>
    %120 = arith.divf %118, %119 : vector<8x64xf32>
    %121 = vector.extract_strided_slice %114 {offsets = [0, 64], sizes = [8, 64], strides = [1, 1]} : vector<8x256xf32> to vector<8x64xf32>
    %122 = arith.negf %121 : vector<8x64xf32>
    %123 = math.exp %122 : vector<8x64xf32>
    %cst_38 = arith.constant 1.000000e+00 : f32
    %124 = vector.broadcast %cst_38 : f32 to vector<8x64xf32>
    %125 = arith.addf %124, %123 : vector<8x64xf32>
    %126 = arith.divf %124, %125 : vector<8x64xf32>
    %127 = vector.extract_strided_slice %114 {offsets = [0, 128], sizes = [8, 64], strides = [1, 1]} : vector<8x256xf32> to vector<8x64xf32>
    %128 = math.tanh %127 : vector<8x64xf32>
    %129 = vector.extract_strided_slice %114 {offsets = [0, 192], sizes = [8, 64], strides = [1, 1]} : vector<8x256xf32> to vector<8x64xf32>
    %130 = arith.negf %129 : vector<8x64xf32>
    %131 = math.exp %130 : vector<8x64xf32>
    %cst_39 = arith.constant 1.000000e+00 : f32
    %132 = vector.broadcast %cst_39 : f32 to vector<8x64xf32>
    %133 = arith.addf %132, %131 : vector<8x64xf32>
    %134 = arith.divf %132, %133 : vector<8x64xf32>
    %135 = arith.mulf %126, %73 : vector<8x64xf32>
    %136 = arith.mulf %120, %128 : vector<8x64xf32>
    %137 = arith.addf %135, %136 : vector<8x64xf32>
    %138 = math.tanh %137 : vector<8x64xf32>
    %139 = arith.mulf %134, %138 : vector<8x64xf32>
    %140 = arith.truncf %103 : vector<8x32xf32> to vector<8x32xbf16>
    %cst_40 = arith.constant dense<0.000000e+00> : vector<8x128xf32>
    %141 = tpu.matmul %140, %9, %cst_40 {dimension_numbers = #tpu.dot_dimension_numbers<[1], [0], [0], [1], [0, 0, 1, 1], [], []>} : vector<8x32xbf16>, vector<32x128xbf16>, vector<8x128xf32> -> vector<8x128xf32>
    %142 = arith.addf %107, %141 : vector<8x128xf32>
    %143 = vector.extract_strided_slice %142 {offsets = [0, 0], sizes = [8, 32], strides = [1, 1]} : vector<8x128xf32> to vector<8x32xf32>
    %144 = arith.negf %143 : vector<8x32xf32>
    %145 = math.exp %144 : vector<8x32xf32>
    %cst_41 = arith.constant 1.000000e+00 : f32
    %146 = vector.broadcast %cst_41 : f32 to vector<8x32xf32>
    %147 = arith.addf %146, %145 : vector<8x32xf32>
    %148 = arith.divf %146, %147 : vector<8x32xf32>
    %149 = vector.extract_strided_slice %142 {offsets = [0, 32], sizes = [8, 32], strides = [1, 1]} : vector<8x128xf32> to vector<8x32xf32>
    %150 = arith.negf %149 : vector<8x32xf32>
    %151 = math.exp %150 : vector<8x32xf32>
    %cst_42 = arith.constant 1.000000e+00 : f32
    %152 = vector.broadcast %cst_42 : f32 to vector<8x32xf32>
    %153 = arith.addf %152, %151 : vector<8x32xf32>
    %154 = arith.divf %152, %153 : vector<8x32xf32>
    %155 = vector.extract_strided_slice %142 {offsets = [0, 64], sizes = [8, 32], strides = [1, 1]} : vector<8x128xf32> to vector<8x32xf32>
    %156 = math.tanh %155 : vector<8x32xf32>
    %157 = vector.extract_strided_slice %142 {offsets = [0, 96], sizes = [8, 32], strides = [1, 1]} : vector<8x128xf32> to vector<8x32xf32>
    %158 = arith.negf %157 : vector<8x32xf32>
    %159 = math.exp %158 : vector<8x32xf32>
    %cst_43 = arith.constant 1.000000e+00 : f32
    %160 = vector.broadcast %cst_43 : f32 to vector<8x32xf32>
    %161 = arith.addf %160, %159 : vector<8x32xf32>
    %162 = arith.divf %160, %161 : vector<8x32xf32>
    %163 = arith.mulf %154, %101 : vector<8x32xf32>
    %164 = arith.mulf %148, %156 : vector<8x32xf32>
    %165 = arith.addf %163, %164 : vector<8x32xf32>
    %166 = math.tanh %165 : vector<8x32xf32>
    %167 = arith.mulf %162, %166 : vector<8x32xf32>
    %168 = arith.truncf %139 : vector<8x64xf32> to vector<8x64xbf16>
    %cst_44 = arith.constant dense<0.000000e+00> : vector<8x128xf32>
    %169 = tpu.matmul %168, %8, %cst_44 {dimension_numbers = #tpu.dot_dimension_numbers<[1], [0], [0], [1], [0, 0, 1, 1], [], []>} : vector<8x64xbf16>, vector<64x128xbf16>, vector<8x128xf32> -> vector<8x128xf32>
    %170 = vector.broadcast %10 : vector<1x128xf32> to vector<8x128xf32>
    %171 = arith.addf %169, %170 : vector<8x128xf32>
    %c3_i32 = arith.constant 3 : i32
    %c8_i32_45 = arith.constant 8 : i32
    %172 = arith.muli %c3_i32, %c8_i32_45 : i32
    %173 = tpu.assume_multiple %172, 8 : i32
    %174 = arith.index_cast %173 : i32 to index
    %c0_46 = arith.constant 0 : index
    %175 = vector.load %arg8[%174, %c0_46] : memref<64x256xf32, #tpu.memory_space<vmem>>, vector<8x256xf32>
    %176 = arith.truncf %139 : vector<8x64xf32> to vector<8x64xbf16>
    %cst_47 = arith.constant dense<0.000000e+00> : vector<8x256xf32>
    %177 = tpu.matmul %176, %7, %cst_47 {dimension_numbers = #tpu.dot_dimension_numbers<[1], [0], [0], [1], [0, 0, 1, 1], [], []>} : vector<8x64xbf16>, vector<64x256xbf16>, vector<8x256xf32> -> vector<8x256xf32>
    %178 = arith.addf %175, %177 : vector<8x256xf32>
    %179 = vector.extract_strided_slice %178 {offsets = [0, 0], sizes = [8, 64], strides = [1, 1]} : vector<8x256xf32> to vector<8x64xf32>
    %180 = arith.negf %179 : vector<8x64xf32>
    %181 = math.exp %180 : vector<8x64xf32>
    %cst_48 = arith.constant 1.000000e+00 : f32
    %182 = vector.broadcast %cst_48 : f32 to vector<8x64xf32>
    %183 = arith.addf %182, %181 : vector<8x64xf32>
    %184 = arith.divf %182, %183 : vector<8x64xf32>
    %185 = vector.extract_strided_slice %178 {offsets = [0, 64], sizes = [8, 64], strides = [1, 1]} : vector<8x256xf32> to vector<8x64xf32>
    %186 = arith.negf %185 : vector<8x64xf32>
    %187 = math.exp %186 : vector<8x64xf32>
    %cst_49 = arith.constant 1.000000e+00 : f32
    %188 = vector.broadcast %cst_49 : f32 to vector<8x64xf32>
    %189 = arith.addf %188, %187 : vector<8x64xf32>
    %190 = arith.divf %188, %189 : vector<8x64xf32>
    %191 = vector.extract_strided_slice %178 {offsets = [0, 128], sizes = [8, 64], strides = [1, 1]} : vector<8x256xf32> to vector<8x64xf32>
    %192 = math.tanh %191 : vector<8x64xf32>
    %193 = vector.extract_strided_slice %178 {offsets = [0, 192], sizes = [8, 64], strides = [1, 1]} : vector<8x256xf32> to vector<8x64xf32>
    %194 = arith.negf %193 : vector<8x64xf32>
    %195 = math.exp %194 : vector<8x64xf32>
    %cst_50 = arith.constant 1.000000e+00 : f32
    %196 = vector.broadcast %cst_50 : f32 to vector<8x64xf32>
    %197 = arith.addf %196, %195 : vector<8x64xf32>
    %198 = arith.divf %196, %197 : vector<8x64xf32>
    %199 = arith.mulf %190, %137 : vector<8x64xf32>
    %200 = arith.mulf %184, %192 : vector<8x64xf32>
    %201 = arith.addf %199, %200 : vector<8x64xf32>
    %202 = math.tanh %201 : vector<8x64xf32>
    %203 = arith.mulf %198, %202 : vector<8x64xf32>
    %204 = arith.truncf %167 : vector<8x32xf32> to vector<8x32xbf16>
    %cst_51 = arith.constant dense<0.000000e+00> : vector<8x128xf32>
    %205 = tpu.matmul %204, %9, %cst_51 {dimension_numbers = #tpu.dot_dimension_numbers<[1], [0], [0], [1], [0, 0, 1, 1], [], []>} : vector<8x32xbf16>, vector<32x128xbf16>, vector<8x128xf32> -> vector<8x128xf32>
    %206 = arith.addf %171, %205 : vector<8x128xf32>
    %207 = vector.extract_strided_slice %206 {offsets = [0, 0], sizes = [8, 32], strides = [1, 1]} : vector<8x128xf32> to vector<8x32xf32>
    %208 = arith.negf %207 : vector<8x32xf32>
    %209 = math.exp %208 : vector<8x32xf32>
    %cst_52 = arith.constant 1.000000e+00 : f32
    %210 = vector.broadcast %cst_52 : f32 to vector<8x32xf32>
    %211 = arith.addf %210, %209 : vector<8x32xf32>
    %212 = arith.divf %210, %211 : vector<8x32xf32>
    %213 = vector.extract_strided_slice %206 {offsets = [0, 32], sizes = [8, 32], strides = [1, 1]} : vector<8x128xf32> to vector<8x32xf32>
    %214 = arith.negf %213 : vector<8x32xf32>
    %215 = math.exp %214 : vector<8x32xf32>
    %cst_53 = arith.constant 1.000000e+00 : f32
    %216 = vector.broadcast %cst_53 : f32 to vector<8x32xf32>
    %217 = arith.addf %216, %215 : vector<8x32xf32>
    %218 = arith.divf %216, %217 : vector<8x32xf32>
    %219 = vector.extract_strided_slice %206 {offsets = [0, 64], sizes = [8, 32], strides = [1, 1]} : vector<8x128xf32> to vector<8x32xf32>
    %220 = math.tanh %219 : vector<8x32xf32>
    %221 = vector.extract_strided_slice %206 {offsets = [0, 96], sizes = [8, 32], strides = [1, 1]} : vector<8x128xf32> to vector<8x32xf32>
    %222 = arith.negf %221 : vector<8x32xf32>
    %223 = math.exp %222 : vector<8x32xf32>
    %cst_54 = arith.constant 1.000000e+00 : f32
    %224 = vector.broadcast %cst_54 : f32 to vector<8x32xf32>
    %225 = arith.addf %224, %223 : vector<8x32xf32>
    %226 = arith.divf %224, %225 : vector<8x32xf32>
    %227 = arith.mulf %218, %165 : vector<8x32xf32>
    %228 = arith.mulf %212, %220 : vector<8x32xf32>
    %229 = arith.addf %227, %228 : vector<8x32xf32>
    %230 = math.tanh %229 : vector<8x32xf32>
    %231 = arith.mulf %226, %230 : vector<8x32xf32>
    %232 = arith.truncf %203 : vector<8x64xf32> to vector<8x64xbf16>
    %cst_55 = arith.constant dense<0.000000e+00> : vector<8x128xf32>
    %233 = tpu.matmul %232, %8, %cst_55 {dimension_numbers = #tpu.dot_dimension_numbers<[1], [0], [0], [1], [0, 0, 1, 1], [], []>} : vector<8x64xbf16>, vector<64x128xbf16>, vector<8x128xf32> -> vector<8x128xf32>
    %234 = vector.broadcast %10 : vector<1x128xf32> to vector<8x128xf32>
    %235 = arith.addf %233, %234 : vector<8x128xf32>
    %c4_i32 = arith.constant 4 : i32
    %c8_i32_56 = arith.constant 8 : i32
    %236 = arith.muli %c4_i32, %c8_i32_56 : i32
    %237 = tpu.assume_multiple %236, 8 : i32
    %238 = arith.index_cast %237 : i32 to index
    %c0_57 = arith.constant 0 : index
    %239 = vector.load %arg8[%238, %c0_57] : memref<64x256xf32, #tpu.memory_space<vmem>>, vector<8x256xf32>
    %240 = arith.truncf %203 : vector<8x64xf32> to vector<8x64xbf16>
    %cst_58 = arith.constant dense<0.000000e+00> : vector<8x256xf32>
    %241 = tpu.matmul %240, %7, %cst_58 {dimension_numbers = #tpu.dot_dimension_numbers<[1], [0], [0], [1], [0, 0, 1, 1], [], []>} : vector<8x64xbf16>, vector<64x256xbf16>, vector<8x256xf32> -> vector<8x256xf32>
    %242 = arith.addf %239, %241 : vector<8x256xf32>
    %243 = vector.extract_strided_slice %242 {offsets = [0, 0], sizes = [8, 64], strides = [1, 1]} : vector<8x256xf32> to vector<8x64xf32>
    %244 = arith.negf %243 : vector<8x64xf32>
    %245 = math.exp %244 : vector<8x64xf32>
    %cst_59 = arith.constant 1.000000e+00 : f32
    %246 = vector.broadcast %cst_59 : f32 to vector<8x64xf32>
    %247 = arith.addf %246, %245 : vector<8x64xf32>
    %248 = arith.divf %246, %247 : vector<8x64xf32>
    %249 = vector.extract_strided_slice %242 {offsets = [0, 64], sizes = [8, 64], strides = [1, 1]} : vector<8x256xf32> to vector<8x64xf32>
    %250 = arith.negf %249 : vector<8x64xf32>
    %251 = math.exp %250 : vector<8x64xf32>
    %cst_60 = arith.constant 1.000000e+00 : f32
    %252 = vector.broadcast %cst_60 : f32 to vector<8x64xf32>
    %253 = arith.addf %252, %251 : vector<8x64xf32>
    %254 = arith.divf %252, %253 : vector<8x64xf32>
    %255 = vector.extract_strided_slice %242 {offsets = [0, 128], sizes = [8, 64], strides = [1, 1]} : vector<8x256xf32> to vector<8x64xf32>
    %256 = math.tanh %255 : vector<8x64xf32>
    %257 = vector.extract_strided_slice %242 {offsets = [0, 192], sizes = [8, 64], strides = [1, 1]} : vector<8x256xf32> to vector<8x64xf32>
    %258 = arith.negf %257 : vector<8x64xf32>
    %259 = math.exp %258 : vector<8x64xf32>
    %cst_61 = arith.constant 1.000000e+00 : f32
    %260 = vector.broadcast %cst_61 : f32 to vector<8x64xf32>
    %261 = arith.addf %260, %259 : vector<8x64xf32>
    %262 = arith.divf %260, %261 : vector<8x64xf32>
    %263 = arith.mulf %254, %201 : vector<8x64xf32>
    %264 = arith.mulf %248, %256 : vector<8x64xf32>
    %265 = arith.addf %263, %264 : vector<8x64xf32>
    %266 = math.tanh %265 : vector<8x64xf32>
    %267 = arith.mulf %262, %266 : vector<8x64xf32>
    %268 = arith.truncf %231 : vector<8x32xf32> to vector<8x32xbf16>
    %cst_62 = arith.constant dense<0.000000e+00> : vector<8x128xf32>
    %269 = tpu.matmul %268, %9, %cst_62 {dimension_numbers = #tpu.dot_dimension_numbers<[1], [0], [0], [1], [0, 0, 1, 1], [], []>} : vector<8x32xbf16>, vector<32x128xbf16>, vector<8x128xf32> -> vector<8x128xf32>
    %270 = arith.addf %235, %269 : vector<8x128xf32>
    %271 = vector.extract_strided_slice %270 {offsets = [0, 0], sizes = [8, 32], strides = [1, 1]} : vector<8x128xf32> to vector<8x32xf32>
    %272 = arith.negf %271 : vector<8x32xf32>
    %273 = math.exp %272 : vector<8x32xf32>
    %cst_63 = arith.constant 1.000000e+00 : f32
    %274 = vector.broadcast %cst_63 : f32 to vector<8x32xf32>
    %275 = arith.addf %274, %273 : vector<8x32xf32>
    %276 = arith.divf %274, %275 : vector<8x32xf32>
    %277 = vector.extract_strided_slice %270 {offsets = [0, 32], sizes = [8, 32], strides = [1, 1]} : vector<8x128xf32> to vector<8x32xf32>
    %278 = arith.negf %277 : vector<8x32xf32>
    %279 = math.exp %278 : vector<8x32xf32>
    %cst_64 = arith.constant 1.000000e+00 : f32
    %280 = vector.broadcast %cst_64 : f32 to vector<8x32xf32>
    %281 = arith.addf %280, %279 : vector<8x32xf32>
    %282 = arith.divf %280, %281 : vector<8x32xf32>
    %283 = vector.extract_strided_slice %270 {offsets = [0, 64], sizes = [8, 32], strides = [1, 1]} : vector<8x128xf32> to vector<8x32xf32>
    %284 = math.tanh %283 : vector<8x32xf32>
    %285 = vector.extract_strided_slice %270 {offsets = [0, 96], sizes = [8, 32], strides = [1, 1]} : vector<8x128xf32> to vector<8x32xf32>
    %286 = arith.negf %285 : vector<8x32xf32>
    %287 = math.exp %286 : vector<8x32xf32>
    %cst_65 = arith.constant 1.000000e+00 : f32
    %288 = vector.broadcast %cst_65 : f32 to vector<8x32xf32>
    %289 = arith.addf %288, %287 : vector<8x32xf32>
    %290 = arith.divf %288, %289 : vector<8x32xf32>
    %291 = arith.mulf %282, %229 : vector<8x32xf32>
    %292 = arith.mulf %276, %284 : vector<8x32xf32>
    %293 = arith.addf %291, %292 : vector<8x32xf32>
    %294 = math.tanh %293 : vector<8x32xf32>
    %295 = arith.mulf %290, %294 : vector<8x32xf32>
    %296 = arith.truncf %267 : vector<8x64xf32> to vector<8x64xbf16>
    %cst_66 = arith.constant dense<0.000000e+00> : vector<8x128xf32>
    %297 = tpu.matmul %296, %8, %cst_66 {dimension_numbers = #tpu.dot_dimension_numbers<[1], [0], [0], [1], [0, 0, 1, 1], [], []>} : vector<8x64xbf16>, vector<64x128xbf16>, vector<8x128xf32> -> vector<8x128xf32>
    %298 = vector.broadcast %10 : vector<1x128xf32> to vector<8x128xf32>
    %299 = arith.addf %297, %298 : vector<8x128xf32>
    %c5_i32 = arith.constant 5 : i32
    %c8_i32_67 = arith.constant 8 : i32
    %300 = arith.muli %c5_i32, %c8_i32_67 : i32
    %301 = tpu.assume_multiple %300, 8 : i32
    %302 = arith.index_cast %301 : i32 to index
    %c0_68 = arith.constant 0 : index
    %303 = vector.load %arg8[%302, %c0_68] : memref<64x256xf32, #tpu.memory_space<vmem>>, vector<8x256xf32>
    %304 = arith.truncf %267 : vector<8x64xf32> to vector<8x64xbf16>
    %cst_69 = arith.constant dense<0.000000e+00> : vector<8x256xf32>
    %305 = tpu.matmul %304, %7, %cst_69 {dimension_numbers = #tpu.dot_dimension_numbers<[1], [0], [0], [1], [0, 0, 1, 1], [], []>} : vector<8x64xbf16>, vector<64x256xbf16>, vector<8x256xf32> -> vector<8x256xf32>
    %306 = arith.addf %303, %305 : vector<8x256xf32>
    %307 = vector.extract_strided_slice %306 {offsets = [0, 0], sizes = [8, 64], strides = [1, 1]} : vector<8x256xf32> to vector<8x64xf32>
    %308 = arith.negf %307 : vector<8x64xf32>
    %309 = math.exp %308 : vector<8x64xf32>
    %cst_70 = arith.constant 1.000000e+00 : f32
    %310 = vector.broadcast %cst_70 : f32 to vector<8x64xf32>
    %311 = arith.addf %310, %309 : vector<8x64xf32>
    %312 = arith.divf %310, %311 : vector<8x64xf32>
    %313 = vector.extract_strided_slice %306 {offsets = [0, 64], sizes = [8, 64], strides = [1, 1]} : vector<8x256xf32> to vector<8x64xf32>
    %314 = arith.negf %313 : vector<8x64xf32>
    %315 = math.exp %314 : vector<8x64xf32>
    %cst_71 = arith.constant 1.000000e+00 : f32
    %316 = vector.broadcast %cst_71 : f32 to vector<8x64xf32>
    %317 = arith.addf %316, %315 : vector<8x64xf32>
    %318 = arith.divf %316, %317 : vector<8x64xf32>
    %319 = vector.extract_strided_slice %306 {offsets = [0, 128], sizes = [8, 64], strides = [1, 1]} : vector<8x256xf32> to vector<8x64xf32>
    %320 = math.tanh %319 : vector<8x64xf32>
    %321 = vector.extract_strided_slice %306 {offsets = [0, 192], sizes = [8, 64], strides = [1, 1]} : vector<8x256xf32> to vector<8x64xf32>
    %322 = arith.negf %321 : vector<8x64xf32>
    %323 = math.exp %322 : vector<8x64xf32>
    %cst_72 = arith.constant 1.000000e+00 : f32
    %324 = vector.broadcast %cst_72 : f32 to vector<8x64xf32>
    %325 = arith.addf %324, %323 : vector<8x64xf32>
    %326 = arith.divf %324, %325 : vector<8x64xf32>
    %327 = arith.mulf %318, %265 : vector<8x64xf32>
    %328 = arith.mulf %312, %320 : vector<8x64xf32>
    %329 = arith.addf %327, %328 : vector<8x64xf32>
    %330 = math.tanh %329 : vector<8x64xf32>
    %331 = arith.mulf %326, %330 : vector<8x64xf32>
    %332 = arith.truncf %295 : vector<8x32xf32> to vector<8x32xbf16>
    %cst_73 = arith.constant dense<0.000000e+00> : vector<8x128xf32>
    %333 = tpu.matmul %332, %9, %cst_73 {dimension_numbers = #tpu.dot_dimension_numbers<[1], [0], [0], [1], [0, 0, 1, 1], [], []>} : vector<8x32xbf16>, vector<32x128xbf16>, vector<8x128xf32> -> vector<8x128xf32>
    %334 = arith.addf %299, %333 : vector<8x128xf32>
    %335 = vector.extract_strided_slice %334 {offsets = [0, 0], sizes = [8, 32], strides = [1, 1]} : vector<8x128xf32> to vector<8x32xf32>
    %336 = arith.negf %335 : vector<8x32xf32>
    %337 = math.exp %336 : vector<8x32xf32>
    %cst_74 = arith.constant 1.000000e+00 : f32
    %338 = vector.broadcast %cst_74 : f32 to vector<8x32xf32>
    %339 = arith.addf %338, %337 : vector<8x32xf32>
    %340 = arith.divf %338, %339 : vector<8x32xf32>
    %341 = vector.extract_strided_slice %334 {offsets = [0, 32], sizes = [8, 32], strides = [1, 1]} : vector<8x128xf32> to vector<8x32xf32>
    %342 = arith.negf %341 : vector<8x32xf32>
    %343 = math.exp %342 : vector<8x32xf32>
    %cst_75 = arith.constant 1.000000e+00 : f32
    %344 = vector.broadcast %cst_75 : f32 to vector<8x32xf32>
    %345 = arith.addf %344, %343 : vector<8x32xf32>
    %346 = arith.divf %344, %345 : vector<8x32xf32>
    %347 = vector.extract_strided_slice %334 {offsets = [0, 64], sizes = [8, 32], strides = [1, 1]} : vector<8x128xf32> to vector<8x32xf32>
    %348 = math.tanh %347 : vector<8x32xf32>
    %349 = vector.extract_strided_slice %334 {offsets = [0, 96], sizes = [8, 32], strides = [1, 1]} : vector<8x128xf32> to vector<8x32xf32>
    %350 = arith.negf %349 : vector<8x32xf32>
    %351 = math.exp %350 : vector<8x32xf32>
    %cst_76 = arith.constant 1.000000e+00 : f32
    %352 = vector.broadcast %cst_76 : f32 to vector<8x32xf32>
    %353 = arith.addf %352, %351 : vector<8x32xf32>
    %354 = arith.divf %352, %353 : vector<8x32xf32>
    %355 = arith.mulf %346, %293 : vector<8x32xf32>
    %356 = arith.mulf %340, %348 : vector<8x32xf32>
    %357 = arith.addf %355, %356 : vector<8x32xf32>
    %358 = math.tanh %357 : vector<8x32xf32>
    %359 = arith.mulf %354, %358 : vector<8x32xf32>
    %360 = arith.truncf %331 : vector<8x64xf32> to vector<8x64xbf16>
    %cst_77 = arith.constant dense<0.000000e+00> : vector<8x128xf32>
    %361 = tpu.matmul %360, %8, %cst_77 {dimension_numbers = #tpu.dot_dimension_numbers<[1], [0], [0], [1], [0, 0, 1, 1], [], []>} : vector<8x64xbf16>, vector<64x128xbf16>, vector<8x128xf32> -> vector<8x128xf32>
    %362 = vector.broadcast %10 : vector<1x128xf32> to vector<8x128xf32>
    %363 = arith.addf %361, %362 : vector<8x128xf32>
    %c6_i32 = arith.constant 6 : i32
    %c8_i32_78 = arith.constant 8 : i32
    %364 = arith.muli %c6_i32, %c8_i32_78 : i32
    %365 = tpu.assume_multiple %364, 8 : i32
    %366 = arith.index_cast %365 : i32 to index
    %c0_79 = arith.constant 0 : index
    %367 = vector.load %arg8[%366, %c0_79] : memref<64x256xf32, #tpu.memory_space<vmem>>, vector<8x256xf32>
    %368 = arith.truncf %331 : vector<8x64xf32> to vector<8x64xbf16>
    %cst_80 = arith.constant dense<0.000000e+00> : vector<8x256xf32>
    %369 = tpu.matmul %368, %7, %cst_80 {dimension_numbers = #tpu.dot_dimension_numbers<[1], [0], [0], [1], [0, 0, 1, 1], [], []>} : vector<8x64xbf16>, vector<64x256xbf16>, vector<8x256xf32> -> vector<8x256xf32>
    %370 = arith.addf %367, %369 : vector<8x256xf32>
    %371 = vector.extract_strided_slice %370 {offsets = [0, 0], sizes = [8, 64], strides = [1, 1]} : vector<8x256xf32> to vector<8x64xf32>
    %372 = arith.negf %371 : vector<8x64xf32>
    %373 = math.exp %372 : vector<8x64xf32>
    %cst_81 = arith.constant 1.000000e+00 : f32
    %374 = vector.broadcast %cst_81 : f32 to vector<8x64xf32>
    %375 = arith.addf %374, %373 : vector<8x64xf32>
    %376 = arith.divf %374, %375 : vector<8x64xf32>
    %377 = vector.extract_strided_slice %370 {offsets = [0, 64], sizes = [8, 64], strides = [1, 1]} : vector<8x256xf32> to vector<8x64xf32>
    %378 = arith.negf %377 : vector<8x64xf32>
    %379 = math.exp %378 : vector<8x64xf32>
    %cst_82 = arith.constant 1.000000e+00 : f32
    %380 = vector.broadcast %cst_82 : f32 to vector<8x64xf32>
    %381 = arith.addf %380, %379 : vector<8x64xf32>
    %382 = arith.divf %380, %381 : vector<8x64xf32>
    %383 = vector.extract_strided_slice %370 {offsets = [0, 128], sizes = [8, 64], strides = [1, 1]} : vector<8x256xf32> to vector<8x64xf32>
    %384 = math.tanh %383 : vector<8x64xf32>
    %385 = vector.extract_strided_slice %370 {offsets = [0, 192], sizes = [8, 64], strides = [1, 1]} : vector<8x256xf32> to vector<8x64xf32>
    %386 = arith.negf %385 : vector<8x64xf32>
    %387 = math.exp %386 : vector<8x64xf32>
    %cst_83 = arith.constant 1.000000e+00 : f32
    %388 = vector.broadcast %cst_83 : f32 to vector<8x64xf32>
    %389 = arith.addf %388, %387 : vector<8x64xf32>
    %390 = arith.divf %388, %389 : vector<8x64xf32>
    %391 = arith.mulf %382, %329 : vector<8x64xf32>
    %392 = arith.mulf %376, %384 : vector<8x64xf32>
    %393 = arith.addf %391, %392 : vector<8x64xf32>
    %394 = math.tanh %393 : vector<8x64xf32>
    %395 = arith.mulf %390, %394 : vector<8x64xf32>
    %396 = arith.truncf %359 : vector<8x32xf32> to vector<8x32xbf16>
    %cst_84 = arith.constant dense<0.000000e+00> : vector<8x128xf32>
    %397 = tpu.matmul %396, %9, %cst_84 {dimension_numbers = #tpu.dot_dimension_numbers<[1], [0], [0], [1], [0, 0, 1, 1], [], []>} : vector<8x32xbf16>, vector<32x128xbf16>, vector<8x128xf32> -> vector<8x128xf32>
    %398 = arith.addf %363, %397 : vector<8x128xf32>
    %399 = vector.extract_strided_slice %398 {offsets = [0, 0], sizes = [8, 32], strides = [1, 1]} : vector<8x128xf32> to vector<8x32xf32>
    %400 = arith.negf %399 : vector<8x32xf32>
    %401 = math.exp %400 : vector<8x32xf32>
    %cst_85 = arith.constant 1.000000e+00 : f32
    %402 = vector.broadcast %cst_85 : f32 to vector<8x32xf32>
    %403 = arith.addf %402, %401 : vector<8x32xf32>
    %404 = arith.divf %402, %403 : vector<8x32xf32>
    %405 = vector.extract_strided_slice %398 {offsets = [0, 32], sizes = [8, 32], strides = [1, 1]} : vector<8x128xf32> to vector<8x32xf32>
    %406 = arith.negf %405 : vector<8x32xf32>
    %407 = math.exp %406 : vector<8x32xf32>
    %cst_86 = arith.constant 1.000000e+00 : f32
    %408 = vector.broadcast %cst_86 : f32 to vector<8x32xf32>
    %409 = arith.addf %408, %407 : vector<8x32xf32>
    %410 = arith.divf %408, %409 : vector<8x32xf32>
    %411 = vector.extract_strided_slice %398 {offsets = [0, 64], sizes = [8, 32], strides = [1, 1]} : vector<8x128xf32> to vector<8x32xf32>
    %412 = math.tanh %411 : vector<8x32xf32>
    %413 = vector.extract_strided_slice %398 {offsets = [0, 96], sizes = [8, 32], strides = [1, 1]} : vector<8x128xf32> to vector<8x32xf32>
    %414 = arith.negf %413 : vector<8x32xf32>
    %415 = math.exp %414 : vector<8x32xf32>
    %cst_87 = arith.constant 1.000000e+00 : f32
    %416 = vector.broadcast %cst_87 : f32 to vector<8x32xf32>
    %417 = arith.addf %416, %415 : vector<8x32xf32>
    %418 = arith.divf %416, %417 : vector<8x32xf32>
    %419 = arith.mulf %410, %357 : vector<8x32xf32>
    %420 = arith.mulf %404, %412 : vector<8x32xf32>
    %421 = arith.addf %419, %420 : vector<8x32xf32>
    %422 = math.tanh %421 : vector<8x32xf32>
    %423 = arith.mulf %418, %422 : vector<8x32xf32>
    %424 = arith.truncf %395 : vector<8x64xf32> to vector<8x64xbf16>
    %cst_88 = arith.constant dense<0.000000e+00> : vector<8x128xf32>
    %425 = tpu.matmul %424, %8, %cst_88 {dimension_numbers = #tpu.dot_dimension_numbers<[1], [0], [0], [1], [0, 0, 1, 1], [], []>} : vector<8x64xbf16>, vector<64x128xbf16>, vector<8x128xf32> -> vector<8x128xf32>
    %426 = vector.broadcast %10 : vector<1x128xf32> to vector<8x128xf32>
    %427 = arith.addf %425, %426 : vector<8x128xf32>
    %c7_i32 = arith.constant 7 : i32
    %c8_i32_89 = arith.constant 8 : i32
    %428 = arith.muli %c7_i32, %c8_i32_89 : i32
    %429 = tpu.assume_multiple %428, 8 : i32
    %430 = arith.index_cast %429 : i32 to index
    %c0_90 = arith.constant 0 : index
    %431 = vector.load %arg8[%430, %c0_90] : memref<64x256xf32, #tpu.memory_space<vmem>>, vector<8x256xf32>
    %432 = arith.truncf %395 : vector<8x64xf32> to vector<8x64xbf16>
    %cst_91 = arith.constant dense<0.000000e+00> : vector<8x256xf32>
    %433 = tpu.matmul %432, %7, %cst_91 {dimension_numbers = #tpu.dot_dimension_numbers<[1], [0], [0], [1], [0, 0, 1, 1], [], []>} : vector<8x64xbf16>, vector<64x256xbf16>, vector<8x256xf32> -> vector<8x256xf32>
    %434 = arith.addf %431, %433 : vector<8x256xf32>
    %435 = vector.extract_strided_slice %434 {offsets = [0, 0], sizes = [8, 64], strides = [1, 1]} : vector<8x256xf32> to vector<8x64xf32>
    %436 = arith.negf %435 : vector<8x64xf32>
    %437 = math.exp %436 : vector<8x64xf32>
    %cst_92 = arith.constant 1.000000e+00 : f32
    %438 = vector.broadcast %cst_92 : f32 to vector<8x64xf32>
    %439 = arith.addf %438, %437 : vector<8x64xf32>
    %440 = arith.divf %438, %439 : vector<8x64xf32>
    %441 = vector.extract_strided_slice %434 {offsets = [0, 64], sizes = [8, 64], strides = [1, 1]} : vector<8x256xf32> to vector<8x64xf32>
    %442 = arith.negf %441 : vector<8x64xf32>
    %443 = math.exp %442 : vector<8x64xf32>
    %cst_93 = arith.constant 1.000000e+00 : f32
    %444 = vector.broadcast %cst_93 : f32 to vector<8x64xf32>
    %445 = arith.addf %444, %443 : vector<8x64xf32>
    %446 = arith.divf %444, %445 : vector<8x64xf32>
    %447 = vector.extract_strided_slice %434 {offsets = [0, 128], sizes = [8, 64], strides = [1, 1]} : vector<8x256xf32> to vector<8x64xf32>
    %448 = math.tanh %447 : vector<8x64xf32>
    %449 = vector.extract_strided_slice %434 {offsets = [0, 192], sizes = [8, 64], strides = [1, 1]} : vector<8x256xf32> to vector<8x64xf32>
    %450 = arith.negf %449 : vector<8x64xf32>
    %451 = math.exp %450 : vector<8x64xf32>
    %cst_94 = arith.constant 1.000000e+00 : f32
    %452 = vector.broadcast %cst_94 : f32 to vector<8x64xf32>
    %453 = arith.addf %452, %451 : vector<8x64xf32>
    %454 = arith.divf %452, %453 : vector<8x64xf32>
    %455 = arith.mulf %446, %393 : vector<8x64xf32>
    %456 = arith.mulf %440, %448 : vector<8x64xf32>
    %457 = arith.addf %455, %456 : vector<8x64xf32>
    %458 = math.tanh %457 : vector<8x64xf32>
    %459 = arith.mulf %454, %458 : vector<8x64xf32>
    %460 = arith.truncf %423 : vector<8x32xf32> to vector<8x32xbf16>
    %cst_95 = arith.constant dense<0.000000e+00> : vector<8x128xf32>
    %461 = tpu.matmul %460, %9, %cst_95 {dimension_numbers = #tpu.dot_dimension_numbers<[1], [0], [0], [1], [0, 0, 1, 1], [], []>} : vector<8x32xbf16>, vector<32x128xbf16>, vector<8x128xf32> -> vector<8x128xf32>
    %462 = arith.addf %427, %461 : vector<8x128xf32>
    %463 = vector.extract_strided_slice %462 {offsets = [0, 0], sizes = [8, 32], strides = [1, 1]} : vector<8x128xf32> to vector<8x32xf32>
    %464 = arith.negf %463 : vector<8x32xf32>
    %465 = math.exp %464 : vector<8x32xf32>
    %cst_96 = arith.constant 1.000000e+00 : f32
    %466 = vector.broadcast %cst_96 : f32 to vector<8x32xf32>
    %467 = arith.addf %466, %465 : vector<8x32xf32>
    %468 = arith.divf %466, %467 : vector<8x32xf32>
    %469 = vector.extract_strided_slice %462 {offsets = [0, 32], sizes = [8, 32], strides = [1, 1]} : vector<8x128xf32> to vector<8x32xf32>
    %470 = arith.negf %469 : vector<8x32xf32>
    %471 = math.exp %470 : vector<8x32xf32>
    %cst_97 = arith.constant 1.000000e+00 : f32
    %472 = vector.broadcast %cst_97 : f32 to vector<8x32xf32>
    %473 = arith.addf %472, %471 : vector<8x32xf32>
    %474 = arith.divf %472, %473 : vector<8x32xf32>
    %475 = vector.extract_strided_slice %462 {offsets = [0, 64], sizes = [8, 32], strides = [1, 1]} : vector<8x128xf32> to vector<8x32xf32>
    %476 = math.tanh %475 : vector<8x32xf32>
    %477 = vector.extract_strided_slice %462 {offsets = [0, 96], sizes = [8, 32], strides = [1, 1]} : vector<8x128xf32> to vector<8x32xf32>
    %478 = arith.negf %477 : vector<8x32xf32>
    %479 = math.exp %478 : vector<8x32xf32>
    %cst_98 = arith.constant 1.000000e+00 : f32
    %480 = vector.broadcast %cst_98 : f32 to vector<8x32xf32>
    %481 = arith.addf %480, %479 : vector<8x32xf32>
    %482 = arith.divf %480, %481 : vector<8x32xf32>
    %483 = arith.mulf %474, %421 : vector<8x32xf32>
    %484 = arith.mulf %468, %476 : vector<8x32xf32>
    %485 = arith.addf %483, %484 : vector<8x32xf32>
    %486 = math.tanh %485 : vector<8x32xf32>
    %487 = arith.mulf %482, %486 : vector<8x32xf32>
    %488 = arith.truncf %459 : vector<8x64xf32> to vector<8x64xbf16>
    %cst_99 = arith.constant dense<0.000000e+00> : vector<8x128xf32>
    %489 = tpu.matmul %488, %8, %cst_99 {dimension_numbers = #tpu.dot_dimension_numbers<[1], [0], [0], [1], [0, 0, 1, 1], [], []>} : vector<8x64xbf16>, vector<64x128xbf16>, vector<8x128xf32> -> vector<8x128xf32>
    %490 = vector.broadcast %10 : vector<1x128xf32> to vector<8x128xf32>
    %491 = arith.addf %489, %490 : vector<8x128xf32>
    %c7_i32_100 = arith.constant 7 : i32
    %492 = arith.truncf %487 : vector<8x32xf32> to vector<8x32xbf16>
    %cst_101 = arith.constant dense<0.000000e+00> : vector<8x128xf32>
    %493 = tpu.matmul %492, %9, %cst_101 {dimension_numbers = #tpu.dot_dimension_numbers<[1], [0], [0], [1], [0, 0, 1, 1], [], []>} : vector<8x32xbf16>, vector<32x128xbf16>, vector<8x128xf32> -> vector<8x128xf32>
    %494 = arith.addf %491, %493 : vector<8x128xf32>
    %495 = vector.extract_strided_slice %494 {offsets = [0, 0], sizes = [8, 32], strides = [1, 1]} : vector<8x128xf32> to vector<8x32xf32>
    %496 = arith.negf %495 : vector<8x32xf32>
    %497 = math.exp %496 : vector<8x32xf32>
    %cst_102 = arith.constant 1.000000e+00 : f32
    %498 = vector.broadcast %cst_102 : f32 to vector<8x32xf32>
    %499 = arith.addf %498, %497 : vector<8x32xf32>
    %500 = arith.divf %498, %499 : vector<8x32xf32>
    %501 = vector.extract_strided_slice %494 {offsets = [0, 32], sizes = [8, 32], strides = [1, 1]} : vector<8x128xf32> to vector<8x32xf32>
    %502 = arith.negf %501 : vector<8x32xf32>
    %503 = math.exp %502 : vector<8x32xf32>
    %cst_103 = arith.constant 1.000000e+00 : f32
    %504 = vector.broadcast %cst_103 : f32 to vector<8x32xf32>
    %505 = arith.addf %504, %503 : vector<8x32xf32>
    %506 = arith.divf %504, %505 : vector<8x32xf32>
    %507 = vector.extract_strided_slice %494 {offsets = [0, 64], sizes = [8, 32], strides = [1, 1]} : vector<8x128xf32> to vector<8x32xf32>
    %508 = math.tanh %507 : vector<8x32xf32>
    %509 = vector.extract_strided_slice %494 {offsets = [0, 96], sizes = [8, 32], strides = [1, 1]} : vector<8x128xf32> to vector<8x32xf32>
    %510 = arith.negf %509 : vector<8x32xf32>
    %511 = math.exp %510 : vector<8x32xf32>
    %cst_104 = arith.constant 1.000000e+00 : f32
    %512 = vector.broadcast %cst_104 : f32 to vector<8x32xf32>
    %513 = arith.addf %512, %511 : vector<8x32xf32>
    %514 = arith.divf %512, %513 : vector<8x32xf32>
    %515 = arith.mulf %506, %485 : vector<8x32xf32>
    %516 = arith.mulf %500, %508 : vector<8x32xf32>
    %517 = arith.addf %515, %516 : vector<8x32xf32>
    %518 = math.tanh %517 : vector<8x32xf32>
    %519 = arith.mulf %514, %518 : vector<8x32xf32>
    %c0_105 = arith.constant 0 : index
    %c0_106 = arith.constant 0 : index
    %520 = vector.load %arg7[%c0_105, %c0_106] : memref<8x32xf32, #tpu.memory_space<vmem>>, vector<8x32xf32>
    tpu.vector_store %arg7[%c0_105, %c0_106], %519 {strides = array<i32>} : memref<8x32xf32, #tpu.memory_space<vmem>>, vector<8x32xf32>,
    return
  }
}

</mosaic_0001>

<llo_original>
// kernel: encoder_forward.1
$region0: #{encoder_forward.1}
  #allocation0 [shape = 'u32[]', space=smem, size = 0x4, offset = 0x4, fixed_abs, tag = 'smem constant byte address 0x4 - core index']
  #allocation1 [shape = 'u32[144,128]{1,0:T(1,128)}', space=vmem, size = 0x12000, scoped, tag = 'internal scratch']
  #allocation2 [shape = 'f32[64,256]{1,0:T(8,128)}', space=vmem, size = 0x10000, scoped, tag = 'scratch operand']
  %s0 = inlined_call_operand.vmem [shape: bf16[64,8], index: 0, kind: input, shape index: {}]
  %s1 = inlined_call_operand.vmem [shape: bf16[8,256], index: 1, kind: input, shape index: {}]
  %s2 = inlined_call_operand.vmem [shape: bf16[64,256], index: 2, kind: input, shape index: {}]
  %s3 = inlined_call_operand.hbm [shape: f32[1,256], index: 3, kind: input, shape index: {}]
  %s4 = inlined_call_operand.hbm [shape: bf16[64,128], index: 4, kind: input, shape index: {}]
  %s5 = inlined_call_operand.hbm [shape: bf16[32,128], index: 5, kind: input, shape index: {}]
  %s6 = inlined_call_operand.vmem [shape: f32[1,128], index: 6, kind: input, shape index: {}]
  %s7 = inlined_call_operand.vmem [shape: f32[8,32], index: 7, kind: output, shape index: {}]
  %s8 = sld [smem:[#allocation0]]
  $region50: #{encoder_forward.1} parent=0
    _
  %s10 = ssub.s32 1, %s8
  %s11 = scalar_select 0, %s10, %s8
  $region1: #{encoder_forward.1} parent=0
    #allocation3 [shape = 'u8[1024]{0}', space=vmem, size = 0x400, scoped, tag = 'input window, operand 3, single buffered']
    #allocation4 [shape = 's32[1]{0}', space=sflag, size = 0x4, scoped, tag = 'scoped memory for encoder_forward.1']
    #allocation5 [shape = 'u8[16384]{0}', space=vmem, size = 0x4000, scoped, tag = 'input window, operand 4, single buffered']
    #allocation6 [shape = 's32[1]{0}', space=sflag, size = 0x4, scoped, tag = 'scoped memory for encoder_forward.1']
    #allocation7 [shape = 'u8[8192]{0}', space=vmem, size = 0x2000, scoped, tag = 'input window, operand 5, single buffered']
    %12 = vsyncpa [#allocation4], 0
    %13 = vsyncpa [#allocation6], 0
    // Predicated region
    $region2: #{encoder_forward.1} parent=1 // pred_check
      _
    $region3: #{encoder_forward.1} parent=1 // pred_check_branch
      %15 = sbr.rel (0) target = $region5
    $region4: #{encoder_forward.1} parent=1 // pred_region
      _
    $region5: #{encoder_forward.1} parent=1 // pred_fallthru
      _
    // Predicated region
    $region6: #{encoder_forward.1} parent=1 // pred_check
      _
    $region7: #{encoder_forward.1} parent=1 // pred_check_branch
      %17 = sbr.rel (0) target = $region9
    $region8: #{encoder_forward.1} parent=1 // pred_region
      _
    $region9: #{encoder_forward.1} parent=1 // pred_fallthru
      _
    // Predicated region
    $region10: #{encoder_forward.1} parent=1 // pred_check
      _
    $region11: #{encoder_forward.1} parent=1 // pred_check_branch
      %19 = sbr.rel (0) target = $region13
    $region12: #{encoder_forward.1} parent=1 // pred_region
      _
    $region13: #{encoder_forward.1} parent=1 // pred_fallthru
      _
    // Predicated region
    $region14: #{encoder_forward.1} parent=1 // pred_check
      _
    $region15: #{encoder_forward.1} parent=1 // pred_check_branch
      %21 = sbr.rel (0) target = $region17
    $region16: #{encoder_forward.1} parent=1 // pred_region
      %s23 = ssub.s32 32, 32
      %24 = vsyncadd [#allocation4], %s23
      %s26 = sshll.u32 [#allocation3], 4
      %s27 = int_to_ptr.vmem [resolvable:$true] %s26
      %29 = dma.hbm_to_vmem [thread:$0]  %s3, 32, %s27, [#allocation4]
    $region17: #{encoder_forward.1} parent=1 // pred_fallthru
      _
    // Predicated region
    $region18: #{encoder_forward.1} parent=1 // pred_check
      _
    $region19: #{encoder_forward.1} parent=1 // pred_check_branch
      %31 = sbr.rel (0) target = $region21
    $region20: #{encoder_forward.1} parent=1 // pred_region
      %s33 = ssub.s32 512, 512
      %34 = vsyncadd [#allocation6], %s33
      %s35 = sshll.u32 [#allocation5], 4
      %s36 = int_to_ptr.vmem [resolvable:$true] %s35
      %41 = dma.hbm_to_vmem [thread:$0]  %s4, 512, %s36, [#allocation6], 64, 64, 4
    $region21: #{encoder_forward.1} parent=1 // pred_fallthru
      _
    // Predicated region
    $region22: #{encoder_forward.1} parent=1 // pred_check
      _
    $region23: #{encoder_forward.1} parent=1 // pred_check_branch
      %43 = sbr.rel (0) target = $region25
    $region24: #{encoder_forward.1} parent=1 // pred_region
      %s45 = ssub.s32 256, 256
      %46 = vsyncadd [#allocation6], %s45
      %s47 = sshll.u32 [#allocation7], 4
      %s48 = int_to_ptr.vmem [resolvable:$true] %s47
      %53 = dma.hbm_to_vmem [thread:$0]  %s5, 256, %s48, [#allocation6], 64, 64, 4
    $region25: #{encoder_forward.1} parent=1 // pred_fallthru
      _
    // Predicated region
    $region26: #{encoder_forward.1} parent=1 // pred_check
      _
    $region27: #{encoder_forward.1} parent=1 // pred_check_branch
      %55 = sbr.rel (0) target = $region29
    $region28: #{encoder_forward.1} parent=1 // pred_region
      _
    $region29: #{encoder_forward.1} parent=1 // pred_fallthru
      _
    // Predicated region
    $region30: #{encoder_forward.1} parent=1 // pred_check
      _
    $region31: #{encoder_forward.1} parent=1 // pred_check_branch
      %57 = sbr.rel (0) target = $region33
    $region32: #{encoder_forward.1} parent=1 // pred_region
      %58 = dma.done [#allocation4], 32
    $region33: #{encoder_forward.1} parent=1 // pred_fallthru
      _
    // Predicated region
    $region34: #{encoder_forward.1} parent=1 // pred_check
      _
    $region35: #{encoder_forward.1} parent=1 // pred_check_branch
      %60 = sbr.rel (0) target = $region37
    $region36: #{encoder_forward.1} parent=1 // pred_region
      %61 = dma.done [#allocation6], 512
    $region37: #{encoder_forward.1} parent=1 // pred_fallthru
      _
    // Predicated region
    $region38: #{encoder_forward.1} parent=1 // pred_check
      _
    $region39: #{encoder_forward.1} parent=1 // pred_check_branch
      %63 = sbr.rel (0) target = $region41
    $region40: #{encoder_forward.1} parent=1 // pred_region
      %64 = dma.done [#allocation6], 256
    $region41: #{encoder_forward.1} parent=1 // pred_fallthru
      _
    %v66 = vld [vmem:[%s0] sm:$0xf]
    %v67 = vld [vmem:[%s0 + $0x4] sm:$0xf]
    %v68 = vld [vmem:[%s0 + $0x8] sm:$0xf]
    %v69 = vld [vmem:[%s0 + $0xc] sm:$0xf]
    %v70 = vld [vmem:[%s0 + $0x10] sm:$0xf]
    %v71 = vld [vmem:[%s0 + $0x14] sm:$0xf]
    %v72 = vld [vmem:[%s0 + $0x18] sm:$0xf]
    %v73 = vld [vmem:[%s0 + $0x1c] sm:$0xf]
    %v74 = vld [vmem:[%s1] sm:$0xff]
    %v75 = vld [vmem:[#allocation3] sm:$0x3]
    %v77 = vlaneseq
    %v78 = vshrl.u32 %v77, 7
    %v79 = vsub.s32 0, %v78
    %v80 = vrot.slane %v75, %v79
    %v81 = vlaneseq
    %v82 = vshrl.u32 %v81, 7
    %v83 = vsub.s32 1, %v82
    %v84 = vrot.slane %v75, %v83
    %v95 = vunpack.c.l.b16 %v66
    %v96 = vunpack.c.l.b16 %v67
    %v97 = vunpack.c.l.b16 %v68
    %v98 = vunpack.c.l.b16 %v69
    %v99 = vunpack.c.l.b16 %v70
    %v100 = vunpack.c.l.b16 %v71
    %v101 = vunpack.c.l.b16 %v72
    %v102 = vunpack.c.l.b16 %v73
    %v103 = vpack.c.b16 %v96, %v95
    %v104 = vpack.c.b16 %v98, %v97
    %v105 = vpack.c.b16 %v100, %v99
    %v106 = vpack.c.b16 %v102, %v101
    %v108 = vunpack.c.l.b16 %v74
    %v109 = vunpack.c.h.b16 %v74
    %v110 = vpack.c.b16 %v108, %v108
    %v111 = vpack.c.b16 %v109, %v109
    %vm112 = vcmask 64512
    %v114 = vsel %vm112, %v103, 0
    %v117 = vsel %vm112, %v104, 0
    %v120 = vsel %vm112, %v105, 0
    %v123 = vsel %vm112, %v106, 0
    %vm125 = vcmask 1043456
    %v127 = vsel %vm125, %v110, 0
    %v130 = vsel %vm125, %v111, 0
    %132 = vmatprep.subr.bf16.mxu0 0
    %133 = vmatpush1.bf16.msra.mxu0 0
    %134 = vmatprep.subr.bf16.mxu0 0
    %135 = vmatpush1.bf16.msra.mxu0 0
    %136 = vmatprep.subr.bf16.mxu0 0
    %137 = vmatpush1.bf16.msra.mxu0 0
    %138 = vmatprep.subr.bf16.mxu0 0
    %139 = vmatpush1.bf16.msra.mxu0 0
    %140 = vmatprep.subr.bf16.mxu0 0
    %141 = vmatpush1.bf16.msra.mxu0 0
    %142 = vmatprep.subr.bf16.mxu0 0
    %143 = vmatpush1.bf16.msra.mxu0 0
    %144 = vmatprep.subr.bf16.mxu0 0
    %145 = vmatpush1.bf16.msra.mxu0 0
    %146 = vmatprep.subr.bf16.mxu0 %v130
    %147 = vmatpush1.bf16.msra.mxu0 %v127
    %148 = vmatprep.subr.bf16.mxu0 0
    %149 = vmatpush2.bf16.msra.mxu0 0
    %150 = vmatprep.subr.bf16.mxu0 0
    %151 = vmatpush2.bf16.msra.mxu0 0
    %152 = vmatprep.subr.bf16.mxu0 0
    %153 = vmatpush2.bf16.msra.mxu0 0
    %154 = vmatprep.subr.bf16.mxu0 0
    %155 = vmatpush2.bf16.msra.mxu0 0
    %156 = vmatprep.subr.bf16.mxu0 0
    %157 = vmatpush2.bf16.msra.mxu0 0
    %158 = vmatprep.subr.bf16.mxu0 0
    %159 = vmatpush2.bf16.msra.mxu0 0
    %160 = vmatprep.subr.bf16.mxu0 0
    %161 = vmatpush2.bf16.msra.mxu0 0
    %162 = vmatprep.subr.bf16.mxu0 0
    %163 = vmatpush2.bf16.msra.mxu0 0
    %164 = vmatprep.mubr.bf16.mxu0 0
    %165 = vmatmul.mubr.bf16.gmra.mxu0 %v114
    %v166 = vpop.f32.mrf.mxu0
    %v167 = vadd.f32 %v80, %v166
    %v168 = vpop.f32.mrf.mxu0
    %v169 = vadd.f32 %v84, %v168
    %v170 = vpop.f32.mrf.mxu0
    %v171 = vadd.f32 %v80, %v170
    %v172 = vpop.f32.mrf.mxu0
    %v173 = vadd.f32 %v84, %v172
    %174 = vmatprep.mubr.bf16.mxu0 0
    %175 = vmatmul.mubr.bf16.gmra.mxu0 %v117
    %v176 = vpop.f32.mrf.mxu0
    %v177 = vadd.f32 %v80, %v176
    %v178 = vpop.f32.mrf.mxu0
    %v179 = vadd.f32 %v84, %v178
    %v180 = vpop.f32.mrf.mxu0
    %v181 = vadd.f32 %v80, %v180
    %v182 = vpop.f32.mrf.mxu0
    %v183 = vadd.f32 %v84, %v182
    %184 = vmatprep.mubr.bf16.mxu0 0
    %185 = vmatmul.mubr.bf16.gmra.mxu0 %v120
    %v186 = vpop.f32.mrf.mxu0
    %v187 = vadd.f32 %v80, %v186
    %v188 = vpop.f32.mrf.mxu0
    %v189 = vadd.f32 %v84, %v188
    %v190 = vpop.f32.mrf.mxu0
    %v191 = vadd.f32 %v80, %v190
    %v192 = vpop.f32.mrf.mxu0
    %v193 = vadd.f32 %v84, %v192
    %194 = vmatprep.mubr.bf16.mxu0 0
    %195 = vmatmul.mubr.bf16.gmra.mxu0 %v123
    %v196 = vpop.f32.mrf.mxu0
    %v197 = vadd.f32 %v80, %v196
    %v198 = vpop.f32.mrf.mxu0
    %v199 = vadd.f32 %v84, %v198
    %v200 = vpop.f32.mrf.mxu0
    %v201 = vadd.f32 %v80, %v200
    %v202 = vpop.f32.mrf.mxu0
    %v203 = vadd.f32 %v84, %v202
    %204 = vdwg.mxu0
    %205 = vst [vmem:[#allocation2] sm:$0xff] %v167
    %206 = vst [vmem:[#allocation2 + $0x8] sm:$0xff] %v169
    %207 = vst [vmem:[#allocation2 + $0x10] sm:$0xff] %v171
    %208 = vst [vmem:[#allocation2 + $0x18] sm:$0xff] %v173
    %209 = vst [vmem:[#allocation2 + $0x20] sm:$0xff] %v177
    %210 = vst [vmem:[#allocation2 + $0x28] sm:$0xff] %v179
    %211 = vst [vmem:[#allocation2 + $0x30] sm:$0xff] %v181
    %212 = vst [vmem:[#allocation2 + $0x38] sm:$0xff] %v183
    %213 = vst [vmem:[#allocation2 + $0x40] sm:$0xff] %v187
    %214 = vst [vmem:[#allocation2 + $0x48] sm:$0xff] %v189
    %215 = vst [vmem:[#allocation2 + $0x50] sm:$0xff] %v191
    %216 = vst [vmem:[#allocation2 + $0x58] sm:$0xff] %v193
    %217 = vst [vmem:[#allocation2 + $0x60] sm:$0xff] %v197
    %218 = vst [vmem:[#allocation2 + $0x68] sm:$0xff] %v199
    %219 = vst [vmem:[#allocation2 + $0x70] sm:$0xff] %v201
    %220 = vst [vmem:[#allocation2 + $0x78] sm:$0xff] %v203
    %v221 = vld [vmem:[%s2] sm:$0xff]
    %v222 = vld [vmem:[%s2 + $0x8] sm:$0xff]
    %v223 = vld [vmem:[%s2 + $0x10] sm:$0xff]
    %v224 = vld [vmem:[%s2 + $0x18] sm:$0xff]
    %v225 = vld [vmem:[%s2 + $0x20] sm:$0xff]
    %v226 = vld [vmem:[%s2 + $0x28] sm:$0xff]
    %v227 = vld [vmem:[%s2 + $0x30] sm:$0xff]
    %v228 = vld [vmem:[%s2 + $0x38] sm:$0xff]
    %v229 = vld [vmem:[#allocation5] sm:$0xf]
    %v230 = vld [vmem:[#allocation5 + $0x4] sm:$0xf]
    %v231 = vld [vmem:[#allocation5 + $0x8] sm:$0xf]
    %v232 = vld [vmem:[#allocation5 + $0xc] sm:$0xf]
    %v233 = vld [vmem:[#allocation5 + $0x10] sm:$0xf]
    %v234 = vld [vmem:[#allocation5 + $0x14] sm:$0xf]
    %v235 = vld [vmem:[#allocation5 + $0x18] sm:$0xf]
    %v236 = vld [vmem:[#allocation5 + $0x1c] sm:$0xf]
    %v237 = vld [vmem:[#allocation7] sm:$0xf]
    %v238 = vld [vmem:[#allocation7 + $0x4] sm:$0xf]
    %v239 = vld [vmem:[#allocation7 + $0x8] sm:$0xf]
    %v240 = vld [vmem:[#allocation7 + $0xc] sm:$0xf]
    %v241 = vld [vmem:[%s6] sm:$0x1]
    %v242 = vld [vmem:[#allocation2] sm:$0xff]
    %v243 = vld [vmem:[#allocation2 + $0x8] sm:$0xff]
    %v244 = vxor.u32 %v242, 2147483648
    %v245 = vmul.f32 %v244, 1.442695
    %v246 = vpow.pop %v245
    %v247 = vadd.f32 %v246, 1.0
    %v248 = vrcp.pop %v247
    %v249 = vmul.f32 1.0, %v248
    %v250 = vtanh.pop %v243
    %v251 = vxor.u32 %v243, 2147483648
    %v252 = vmul.f32 %v251, 1.442695
    %v253 = vpow.pop %v252
    %v254 = vadd.f32 %v253, 1.0
    %v255 = vrcp.pop %v254
    %v256 = vmul.f32 1.0, %v255
    %v257 = vmul.f32 %v249, 0.0
    %v258 = vmul.f32 %v249, %v250
    %260 = vrot.lane.b32.xlu0 %v258, 64
    %v261 = vpop.permute.xlu0 %260
    %v263 = vadd.f32 %v257, %v261
    %v264 = vtanh.pop %v263
    %v265 = vmul.f32 %v256, %v264
    %v266 = vpack.c.bf16 %v265, %v265
    %v268 = vlaneseq
    %v269 = vshrl.u32 %v268, 7
    %v270 = vsub.s32 0, %v269
    %v271 = vrot.slane %v241, %v270
    %274 = vrot.lane.b32.xlu0 %v266, 64
    %v275 = vpop.permute.xlu0 %274
    %v284 = vunpack.c.l.b16 %v229
    %v285 = vunpack.c.l.b16 %v230
    %v286 = vunpack.c.l.b16 %v231
    %v287 = vunpack.c.l.b16 %v232
    %v288 = vunpack.c.l.b16 %v233
    %v289 = vunpack.c.l.b16 %v234
    %v290 = vunpack.c.l.b16 %v235
    %v291 = vunpack.c.l.b16 %v236
    %v292 = vpack.c.b16 %v285, %v284
    %v293 = vpack.c.b16 %v287, %v286
    %v294 = vpack.c.b16 %v289, %v288
    %v295 = vpack.c.b16 %v291, %v290
    %vm300 = vcmask 523264
    %v302 = vsel %vm300, %v275, 0
    %304 = vmatprep.subr.bf16.mxu0 0
    %305 = vmatpush1.bf16.msra.mxu0 0
    %306 = vmatprep.subr.bf16.mxu0 0
    %307 = vmatpush1.bf16.msra.mxu0 0
    %308 = vmatprep.subr.bf16.mxu0 0
    %309 = vmatpush1.bf16.msra.mxu0 0
    %310 = vmatprep.subr.bf16.mxu0 0
    %311 = vmatpush1.bf16.msra.mxu0 0
    %312 = vmatprep.subr.bf16.mxu0 0
    %313 = vmatpush1.bf16.msra.mxu0 %v295
    %314 = vmatprep.subr.bf16.mxu0 0
    %315 = vmatpush1.bf16.msra.mxu0 %v294
    %316 = vmatprep.subr.bf16.mxu0 0
    %317 = vmatpush1.bf16.msra.mxu0 %v293
    %318 = vmatprep.subr.bf16.mxu0 0
    %319 = vmatpush1.bf16.msra.mxu0 %v292
    %320 = vmatprep.subr.bf16.mxu0 0
    %321 = vmatpush2.bf16.msra.mxu0 0
    %322 = vmatprep.subr.bf16.mxu0 0
    %323 = vmatpush2.bf16.msra.mxu0 0
    %324 = vmatprep.subr.bf16.mxu0 0
    %325 = vmatpush2.bf16.msra.mxu0 0
    %326 = vmatprep.subr.bf16.mxu0 0
    %327 = vmatpush2.bf16.msra.mxu0 0
    %328 = vmatprep.subr.bf16.mxu0 0
    %329 = vmatpush2.bf16.msra.mxu0 0
    %330 = vmatprep.subr.bf16.mxu0 0
    %331 = vmatpush2.bf16.msra.mxu0 0
    %332 = vmatprep.subr.bf16.mxu0 0
    %333 = vmatpush2.bf16.msra.mxu0 0
    %334 = vmatprep.subr.bf16.mxu0 0
    %335 = vmatpush2.bf16.msra.mxu0 0
    %336 = vmatprep.mubr.bf16.mxu0 0
    %337 = vmatmul.mubr.bf16.gmra.mxu0 %v302
    %v338 = vpop.f32.mrf.mxu0
    %v339 = vadd.f32 %v271, %v338
    %v340 = vpop.f32.mrf.mxu0
    %v341 = vpop.f32.mrf.mxu0
    %v342 = vpop.f32.mrf.mxu0
    %343 = vdwg.mxu0
    %s344 = smul.u32 1, 2
    %s345 = smul.addr %s344, 8
    %s346 = scalar_lea.vmem [#allocation2], %s345
    %v347 = vld [vmem:[%s346] sm:$0xff]
    %v348 = vld [vmem:[%s346 + $0x8] sm:$0xff]
    %v357 = vunpack.c.l.b16 %v221
    %v358 = vunpack.c.h.b16 %v221
    %v359 = vunpack.c.l.b16 %v222
    %v360 = vunpack.c.h.b16 %v222
    %v361 = vunpack.c.l.b16 %v223
    %v362 = vunpack.c.h.b16 %v223
    %v363 = vunpack.c.l.b16 %v224
    %v364 = vunpack.c.h.b16 %v224
    %v365 = vunpack.c.l.b16 %v225
    %v366 = vunpack.c.h.b16 %v225
    %v367 = vunpack.c.l.b16 %v226
    %v368 = vunpack.c.h.b16 %v226
    %v369 = vunpack.c.l.b16 %v227
    %v370 = vunpack.c.h.b16 %v227
    %v371 = vunpack.c.l.b16 %v228
    %v372 = vunpack.c.h.b16 %v228
    %v373 = vpack.c.b16 %v359, %v357
    %v374 = vpack.c.b16 %v360, %v358
    %v375 = vpack.c.b16 %v363, %v361
    %v376 = vpack.c.b16 %v364, %v362
    %v377 = vpack.c.b16 %v367, %v365
    %v378 = vpack.c.b16 %v368, %v366
    %v379 = vpack.c.b16 %v371, %v369
    %v380 = vpack.c.b16 %v372, %v370
    %389 = vmatprep.subr.bf16.mxu0 0
    %390 = vmatpush1.bf16.msra.mxu0 0
    %391 = vmatprep.subr.bf16.mxu0 0
    %392 = vmatpush1.bf16.msra.mxu0 0
    %393 = vmatprep.subr.bf16.mxu0 0
    %394 = vmatpush1.bf16.msra.mxu0 0
    %395 = vmatprep.subr.bf16.mxu0 0
    %396 = vmatpush1.bf16.msra.mxu0 0
    %397 = vmatprep.subr.bf16.mxu0 %v380
    %398 = vmatpush1.bf16.msra.mxu0 %v379
    %399 = vmatprep.subr.bf16.mxu0 %v378
    %400 = vmatpush1.bf16.msra.mxu0 %v377
    %401 = vmatprep.subr.bf16.mxu0 %v376
    %402 = vmatpush1.bf16.msra.mxu0 %v375
    %403 = vmatprep.subr.bf16.mxu0 %v374
    %404 = vmatpush1.bf16.msra.mxu0 %v373
    %405 = vmatprep.subr.bf16.mxu0 0
    %406 = vmatpush2.bf16.msra.mxu0 0
    %407 = vmatprep.subr.bf16.mxu0 0
    %408 = vmatpush2.bf16.msra.mxu0 0
    %409 = vmatprep.subr.bf16.mxu0 0
    %410 = vmatpush2.bf16.msra.mxu0 0
    %411 = vmatprep.subr.bf16.mxu0 0
    %412 = vmatpush2.bf16.msra.mxu0 0
    %413 = vmatprep.subr.bf16.mxu0 0
    %414 = vmatpush2.bf16.msra.mxu0 0
    %415 = vmatprep.subr.bf16.mxu0 0
    %416 = vmatpush2.bf16.msra.mxu0 0
    %417 = vmatprep.subr.bf16.mxu0 0
    %418 = vmatpush2.bf16.msra.mxu0 0
    %419 = vmatprep.subr.bf16.mxu0 0
    %420 = vmatpush2.bf16.msra.mxu0 0
    %421 = vmatprep.mubr.bf16.mxu0 0
    %422 = vmatmul.mubr.bf16.gmra.mxu0 %v302
    %v423 = vpop.f32.mrf.mxu0
    %v424 = vadd.f32 0.0, %v423
    %v425 = vpop.f32.mrf.mxu0
    %v426 = vadd.f32 0.0, %v425
    %v427 = vpop.f32.mrf.mxu0
    %v428 = vpop.f32.mrf.mxu0
    %429 = vdwg.mxu0
    %v430 = vadd.f32 %v347, %v424
    %v431 = vadd.f32 %v348, %v426
    %v432 = vxor.u32 %v430, 2147483648
    %v433 = vmul.f32 %v432, 1.442695
    %v434 = vpow.pop %v433
    %v435 = vadd.f32 %v434, 1.0
    %v436 = vrcp.pop %v435
    %v437 = vmul.f32 1.0, %v436
    %v438 = vtanh.pop %v431
    %v439 = vxor.u32 %v431, 2147483648
    %v440 = vmul.f32 %v439, 1.442695
    %v441 = vpow.pop %v440
    %v442 = vadd.f32 %v441, 1.0
    %v443 = vrcp.pop %v442
    %v444 = vmul.f32 1.0, %v443
    %v445 = vmul.f32 %v437, %v263
    %v446 = vmul.f32 %v437, %v438
    %448 = vrot.lane.b32.xlu0 %v446, 64
    %v449 = vpop.permute.xlu0 %448
    %v451 = vadd.f32 %v445, %v449
    %v452 = vtanh.pop %v451
    %v453 = vmul.f32 %v444, %v452
    %v458 = vunpack.c.l.b16 %v237
    %v459 = vunpack.c.l.b16 %v238
    %v460 = vunpack.c.l.b16 %v239
    %v461 = vunpack.c.l.b16 %v240
    %v462 = vpack.c.b16 %v459, %v458
    %v463 = vpack.c.b16 %v461, %v460
    %vm466 = vcmask 261120
    %v468 = vsel %vm466, 0, 0
    %470 = vmatprep.subr.bf16.mxu0 0
    %471 = vmatpush1.bf16.msra.mxu0 0
    %472 = vmatprep.subr.bf16.mxu0 0
    %473 = vmatpush1.bf16.msra.mxu0 0
    %474 = vmatprep.subr.bf16.mxu0 0
    %475 = vmatpush1.bf16.msra.mxu0 0
    %476 = vmatprep.subr.bf16.mxu0 0
    %477 = vmatpush1.bf16.msra.mxu0 0
    %478 = vmatprep.subr.bf16.mxu0 0
    %479 = vmatpush1.bf16.msra.mxu0 0
    %480 = vmatprep.subr.bf16.mxu0 0
    %481 = vmatpush1.bf16.msra.mxu0 0
    %482 = vmatprep.subr.bf16.mxu0 0
    %483 = vmatpush1.bf16.msra.mxu0 %v463
    %484 = vmatprep.subr.bf16.mxu0 0
    %485 = vmatpush1.bf16.msra.mxu0 %v462
    %486 = vmatprep.subr.bf16.mxu0 0
    %487 = vmatpush2.bf16.msra.mxu0 0
    %488 = vmatprep.subr.bf16.mxu0 0
    %489 = vmatpush2.bf16.msra.mxu0 0
    %490 = vmatprep.subr.bf16.mxu0 0
    %491 = vmatpush2.bf16.msra.mxu0 0
    %492 = vmatprep.subr.bf16.mxu0 0
    %493 = vmatpush2.bf16.msra.mxu0 0
    %494 = vmatprep.subr.bf16.mxu0 0
    %495 = vmatpush2.bf16.msra.mxu0 0
    %496 = vmatprep.subr.bf16.mxu0 0
    %497 = vmatpush2.bf16.msra.mxu0 0
    %498 = vmatprep.subr.bf16.mxu0 0
    %499 = vmatpush2.bf16.msra.mxu0 0
    %500 = vmatprep.subr.bf16.mxu0 0
    %501 = vmatpush2.bf16.msra.mxu0 0
    %502 = vmatprep.mubr.bf16.mxu0 0
    %503 = vmatmul.mubr.bf16.gmra.mxu0 %v468
    %v504 = vpop.f32.mrf.mxu0
    %v505 = vadd.f32 0.0, %v504
    %v506 = vpop.f32.mrf.mxu0
    %v507 = vpop.f32.mrf.mxu0
    %v508 = vpop.f32.mrf.mxu0
    %509 = vdwg.mxu0
    %v510 = vadd.f32 %v339, %v505
    %v511 = vxor.u32 %v510, 2147483648
    %v512 = vmul.f32 %v511, 1.442695
    %v513 = vpow.pop %v512
    %v514 = vadd.f32 %v513, 1.0
    %v515 = vrcp.pop %v514
    %v516 = vmul.f32 1.0, %v515
    %v517 = vtanh.pop %v510
    %v518 = vmul.f32 %v516, 0.0
    %520 = vrot.lane.b32.xlu0 %v517, 64
    %v521 = vpop.permute.xlu0 %520
    %v523 = vmul.f32 %v516, %v521
    %525 = vrot.lane.b32.xlu0 %v523, 32
    %v526 = vpop.permute.xlu0 %525
    %v528 = vadd.f32 %v518, %v526
    %v529 = vtanh.pop %v528
    %531 = vrot.lane.b32.xlu0 %v529, 64
    %v532 = vpop.permute.xlu0 %531
    %v534 = vmul.f32 %v516, %v532
    %v535 = vpack.c.bf16 %v453, %v453
    %537 = vrot.lane.b32.xlu0 %v535, 64
    %v538 = vpop.permute.xlu0 %537
    %v540 = vsel %vm300, %v538, 0
    %542 = vmatprep.subr.bf16.mxu0 0
    %543 = vmatpush1.bf16.msra.mxu0 0
    %544 = vmatprep.subr.bf16.mxu0 0
    %545 = vmatpush1.bf16.msra.mxu0 0
    %546 = vmatprep.subr.bf16.mxu0 0
    %547 = vmatpush1.bf16.msra.mxu0 0
    %548 = vmatprep.subr.bf16.mxu0 0
    %549 = vmatpush1.bf16.msra.mxu0 0
    %550 = vmatprep.subr.bf16.mxu0 0
    %551 = vmatpush1.bf16.msra.mxu0 %v295
    %552 = vmatprep.subr.bf16.mxu0 0
    %553 = vmatpush1.bf16.msra.mxu0 %v294
    %554 = vmatprep.subr.bf16.mxu0 0
    %555 = vmatpush1.bf16.msra.mxu0 %v293
    %556 = vmatprep.subr.bf16.mxu0 0
    %557 = vmatpush1.bf16.msra.mxu0 %v292
    %558 = vmatprep.subr.bf16.mxu0 0
    %559 = vmatpush2.bf16.msra.mxu0 0
    %560 = vmatprep.subr.bf16.mxu0 0
    %561 = vmatpush2.bf16.msra.mxu0 0
    %562 = vmatprep.subr.bf16.mxu0 0
    %563 = vmatpush2.bf16.msra.mxu0 0
    %564 = vmatprep.subr.bf16.mxu0 0
    %565 = vmatpush2.bf16.msra.mxu0 0
    %566 = vmatprep.subr.bf16.mxu0 0
    %567 = vmatpush2.bf16.msra.mxu0 0
    %568 = vmatprep.subr.bf16.mxu0 0
    %569 = vmatpush2.bf16.msra.mxu0 0
    %570 = vmatprep.subr.bf16.mxu0 0
    %571 = vmatpush2.bf16.msra.mxu0 0
    %572 = vmatprep.subr.bf16.mxu0 0
    %573 = vmatpush2.bf16.msra.mxu0 0
    %574 = vmatprep.mubr.bf16.mxu0 0
    %575 = vmatmul.mubr.bf16.gmra.mxu0 %v540
    %v576 = vpop.f32.mrf.mxu0
    %v577 = vadd.f32 %v271, %v576
    %v578 = vpop.f32.mrf.mxu0
    %v579 = vpop.f32.mrf.mxu0
    %v580 = vpop.f32.mrf.mxu0
    %581 = vdwg.mxu0
    %s582 = smul.u32 2, 2
    %s583 = smul.addr %s582, 8
    %s584 = scalar_lea.vmem [#allocation2], %s583
    %v585 = vld [vmem:[%s584] sm:$0xff]
    %v586 = vld [vmem:[%s584 + $0x8] sm:$0xff]
    %587 = vmatprep.subr.bf16.mxu0 0
    %588 = vmatpush1.bf16.msra.mxu0 0
    %589 = vmatprep.subr.bf16.mxu0 0
    %590 = vmatpush1.bf16.msra.mxu0 0
    %591 = vmatprep.subr.bf16.mxu0 0
    %592 = vmatpush1.bf16.msra.mxu0 0
    %593 = vmatprep.subr.bf16.mxu0 0
    %594 = vmatpush1.bf16.msra.mxu0 0
    %595 = vmatprep.subr.bf16.mxu0 %v380
    %596 = vmatpush1.bf16.msra.mxu0 %v379
    %597 = vmatprep.subr.bf16.mxu0 %v378
    %598 = vmatpush1.bf16.msra.mxu0 %v377
    %599 = vmatprep.subr.bf16.mxu0 %v376
    %600 = vmatpush1.bf16.msra.mxu0 %v375
    %601 = vmatprep.subr.bf16.mxu0 %v374
    %602 = vmatpush1.bf16.msra.mxu0 %v373
    %603 = vmatprep.subr.bf16.mxu0 0
    %604 = vmatpush2.bf16.msra.mxu0 0
    %605 = vmatprep.subr.bf16.mxu0 0
    %606 = vmatpush2.bf16.msra.mxu0 0
    %607 = vmatprep.subr.bf16.mxu0 0
    %608 = vmatpush2.bf16.msra.mxu0 0
    %609 = vmatprep.subr.bf16.mxu0 0
    %610 = vmatpush2.bf16.msra.mxu0 0
    %611 = vmatprep.subr.bf16.mxu0 0
    %612 = vmatpush2.bf16.msra.mxu0 0
    %613 = vmatprep.subr.bf16.mxu0 0
    %614 = vmatpush2.bf16.msra.mxu0 0
    %615 = vmatprep.subr.bf16.mxu0 0
    %616 = vmatpush2.bf16.msra.mxu0 0
    %617 = vmatprep.subr.bf16.mxu0 0
    %618 = vmatpush2.bf16.msra.mxu0 0
    %619 = vmatprep.mubr.bf16.mxu0 0
    %620 = vmatmul.mubr.bf16.gmra.mxu0 %v540
    %v621 = vpop.f32.mrf.mxu0
    %v622 = vadd.f32 0.0, %v621
    %v623 = vpop.f32.mrf.mxu0
    %v624 = vadd.f32 0.0, %v623
    %v625 = vpop.f32.mrf.mxu0
    %v626 = vpop.f32.mrf.mxu0
    %627 = vdwg.mxu0
    %v628 = vadd.f32 %v585, %v622
    %v629 = vadd.f32 %v586, %v624
    %v630 = vxor.u32 %v628, 2147483648
    %v631 = vmul.f32 %v630, 1.442695
    %v632 = vpow.pop %v631
    %v633 = vadd.f32 %v632, 1.0
    %v634 = vrcp.pop %v633
    %v635 = vmul.f32 1.0, %v634
    %v636 = vtanh.pop %v629
    %v637 = vxor.u32 %v629, 2147483648
    %v638 = vmul.f32 %v637, 1.442695
    %v639 = vpow.pop %v638
    %v640 = vadd.f32 %v639, 1.0
    %v641 = vrcp.pop %v640
    %v642 = vmul.f32 1.0, %v641
    %v643 = vmul.f32 %v635, %v451
    %v644 = vmul.f32 %v635, %v636
    %646 = vrot.lane.b32.xlu0 %v644, 64
    %v647 = vpop.permute.xlu0 %646
    %v649 = vadd.f32 %v643, %v647
    %v650 = vtanh.pop %v649
    %v651 = vmul.f32 %v642, %v650
    %v652 = vpack.c.bf16 %v534, %v534
    %654 = vrot.lane.b32.xlu0 %v652, 32
    %v655 = vpop.permute.xlu0 %654
    %v657 = vsel %vm466, %v655, 0
    %659 = vmatprep.subr.bf16.mxu0 0
    %660 = vmatpush1.bf16.msra.mxu0 0
    %661 = vmatprep.subr.bf16.mxu0 0
    %662 = vmatpush1.bf16.msra.mxu0 0
    %663 = vmatprep.subr.bf16.mxu0 0
    %664 = vmatpush1.bf16.msra.mxu0 0
    %665 = vmatprep.subr.bf16.mxu0 0
    %666 = vmatpush1.bf16.msra.mxu0 0
    %667 = vmatprep.subr.bf16.mxu0 0
    %668 = vmatpush1.bf16.msra.mxu0 0
    %669 = vmatprep.subr.bf16.mxu0 0
    %670 = vmatpush1.bf16.msra.mxu0 0
    %671 = vmatprep.subr.bf16.mxu0 0
    %672 = vmatpush1.bf16.msra.mxu0 %v463
    %673 = vmatprep.subr.bf16.mxu0 0
    %674 = vmatpush1.bf16.msra.mxu0 %v462
    %675 = vmatprep.subr.bf16.mxu0 0
    %676 = vmatpush2.bf16.msra.mxu0 0
    %677 = vmatprep.subr.bf16.mxu0 0
    %678 = vmatpush2.bf16.msra.mxu0 0
    %679 = vmatprep.subr.bf16.mxu0 0
    %680 = vmatpush2.bf16.msra.mxu0 0
    %681 = vmatprep.subr.bf16.mxu0 0
    %682 = vmatpush2.bf16.msra.mxu0 0
    %683 = vmatprep.subr.bf16.mxu0 0
    %684 = vmatpush2.bf16.msra.mxu0 0
    %685 = vmatprep.subr.bf16.mxu0 0
    %686 = vmatpush2.bf16.msra.mxu0 0
    %687 = vmatprep.subr.bf16.mxu0 0
    %688 = vmatpush2.bf16.msra.mxu0 0
    %689 = vmatprep.subr.bf16.mxu0 0
    %690 = vmatpush2.bf16.msra.mxu0 0
    %691 = vmatprep.mubr.bf16.mxu0 0
    %692 = vmatmul.mubr.bf16.gmra.mxu0 %v657
    %v693 = vpop.f32.mrf.mxu0
    %v694 = vadd.f32 0.0, %v693
    %v695 = vpop.f32.mrf.mxu0
    %v696 = vpop.f32.mrf.mxu0
    %v697 = vpop.f32.mrf.mxu0
    %698 = vdwg.mxu0
    %v699 = vadd.f32 %v577, %v694
    %v700 = vxor.u32 %v699, 2147483648
    %v701 = vmul.f32 %v700, 1.442695
    %v702 = vpow.pop %v701
    %v703 = vadd.f32 %v702, 1.0
    %v704 = vrcp.pop %v703
    %v705 = vmul.f32 1.0, %v704
    %v706 = vtanh.pop %v699
    %v707 = vmul.f32 %v705, %v528
    %709 = vrot.lane.b32.xlu0 %v706, 64
    %v710 = vpop.permute.xlu0 %709
    %v712 = vmul.f32 %v705, %v710
    %714 = vrot.lane.b32.xlu0 %v712, 32
    %v715 = vpop.permute.xlu0 %714
    %v717 = vadd.f32 %v707, %v715
    %v718 = vtanh.pop %v717
    %720 = vrot.lane.b32.xlu0 %v718, 64
    %v721 = vpop.permute.xlu0 %720
    %v723 = vmul.f32 %v705, %v721
    %v724 = vpack.c.bf16 %v651, %v651
    %726 = vrot.lane.b32.xlu0 %v724, 64
    %v727 = vpop.permute.xlu0 %726
    %v729 = vsel %vm300, %v727, 0
    %731 = vmatprep.subr.bf16.mxu0 0
    %732 = vmatpush1.bf16.msra.mxu0 0
    %733 = vmatprep.subr.bf16.mxu0 0
    %734 = vmatpush1.bf16.msra.mxu0 0
    %735 = vmatprep.subr.bf16.mxu0 0
    %736 = vmatpush1.bf16.msra.mxu0 0
    %737 = vmatprep.subr.bf16.mxu0 0
    %738 = vmatpush1.bf16.msra.mxu0 0
    %739 = vmatprep.subr.bf16.mxu0 0
    %740 = vmatpush1.bf16.msra.mxu0 %v295
    %741 = vmatprep.subr.bf16.mxu0 0
    %742 = vmatpush1.bf16.msra.mxu0 %v294
    %743 = vmatprep.subr.bf16.mxu0 0
    %744 = vmatpush1.bf16.msra.mxu0 %v293
    %745 = vmatprep.subr.bf16.mxu0 0
    %746 = vmatpush1.bf16.msra.mxu0 %v292
    %747 = vmatprep.subr.bf16.mxu0 0
    %748 = vmatpush2.bf16.msra.mxu0 0
    %749 = vmatprep.subr.bf16.mxu0 0
    %750 = vmatpush2.bf16.msra.mxu0 0
    %751 = vmatprep.subr.bf16.mxu0 0
    %752 = vmatpush2.bf16.msra.mxu0 0
    %753 = vmatprep.subr.bf16.mxu0 0
    %754 = vmatpush2.bf16.msra.mxu0 0
    %755 = vmatprep.subr.bf16.mxu0 0
    %756 = vmatpush2.bf16.msra.mxu0 0
    %757 = vmatprep.subr.bf16.mxu0 0
    %758 = vmatpush2.bf16.msra.mxu0 0
    %759 = vmatprep.subr.bf16.mxu0 0
    %760 = vmatpush2.bf16.msra.mxu0 0
    %761 = vmatprep.subr.bf16.mxu0 0
    %762 = vmatpush2.bf16.msra.mxu0 0
    %763 = vmatprep.mubr.bf16.mxu0 0
    %764 = vmatmul.mubr.bf16.gmra.mxu0 %v729
    %v765 = vpop.f32.mrf.mxu0
    %v766 = vadd.f32 %v271, %v765
    %v767 = vpop.f32.mrf.mxu0
    %v768 = vpop.f32.mrf.mxu0
    %v769 = vpop.f32.mrf.mxu0
    %770 = vdwg.mxu0
    %s771 = smul.u32 3, 2
    %s772 = smul.addr %s771, 8
    %s773 = scalar_lea.vmem [#allocation2], %s772
    %v774 = vld [vmem:[%s773] sm:$0xff]
    %v775 = vld [vmem:[%s773 + $0x8] sm:$0xff]
    %776 = vmatprep.subr.bf16.mxu0 0
    %777 = vmatpush1.bf16.msra.mxu0 0
    %778 = vmatprep.subr.bf16.mxu0 0
    %779 = vmatpush1.bf16.msra.mxu0 0
    %780 = vmatprep.subr.bf16.mxu0 0
    %781 = vmatpush1.bf16.msra.mxu0 0
    %782 = vmatprep.subr.bf16.mxu0 0
    %783 = vmatpush1.bf16.msra.mxu0 0
    %784 = vmatprep.subr.bf16.mxu0 %v380
    %785 = vmatpush1.bf16.msra.mxu0 %v379
    %786 = vmatprep.subr.bf16.mxu0 %v378
    %787 = vmatpush1.bf16.msra.mxu0 %v377
    %788 = vmatprep.subr.bf16.mxu0 %v376
    %789 = vmatpush1.bf16.msra.mxu0 %v375
    %790 = vmatprep.subr.bf16.mxu0 %v374
    %791 = vmatpush1.bf16.msra.mxu0 %v373
    %792 = vmatprep.subr.bf16.mxu0 0
    %793 = vmatpush2.bf16.msra.mxu0 0
    %794 = vmatprep.subr.bf16.mxu0 0
    %795 = vmatpush2.bf16.msra.mxu0 0
    %796 = vmatprep.subr.bf16.mxu0 0
    %797 = vmatpush2.bf16.msra.mxu0 0
    %798 = vmatprep.subr.bf16.mxu0 0
    %799 = vmatpush2.bf16.msra.mxu0 0
    %800 = vmatprep.subr.bf16.mxu0 0
    %801 = vmatpush2.bf16.msra.mxu0 0
    %802 = vmatprep.subr.bf16.mxu0 0
    %803 = vmatpush2.bf16.msra.mxu0 0
    %804 = vmatprep.subr.bf16.mxu0 0
    %805 = vmatpush2.bf16.msra.mxu0 0
    %806 = vmatprep.subr.bf16.mxu0 0
    %807 = vmatpush2.bf16.msra.mxu0 0
    %808 = vmatprep.mubr.bf16.mxu0 0
    %809 = vmatmul.mubr.bf16.gmra.mxu0 %v729
    %v810 = vpop.f32.mrf.mxu0
    %v811 = vadd.f32 0.0, %v810
    %v812 = vpop.f32.mrf.mxu0
    %v813 = vadd.f32 0.0, %v812
    %v814 = vpop.f32.mrf.mxu0
    %v815 = vpop.f32.mrf.mxu0
    %816 = vdwg.mxu0
    %v817 = vadd.f32 %v774, %v811
    %v818 = vadd.f32 %v775, %v813
    %v819 = vxor.u32 %v817, 2147483648
    %v820 = vmul.f32 %v819, 1.442695
    %v821 = vpow.pop %v820
    %v822 = vadd.f32 %v821, 1.0
    %v823 = vrcp.pop %v822
    %v824 = vmul.f32 1.0, %v823
    %v825 = vtanh.pop %v818
    %v826 = vxor.u32 %v818, 2147483648
    %v827 = vmul.f32 %v826, 1.442695
    %v828 = vpow.pop %v827
    %v829 = vadd.f32 %v828, 1.0
    %v830 = vrcp.pop %v829
    %v831 = vmul.f32 1.0, %v830
    %v832 = vmul.f32 %v824, %v649
    %v833 = vmul.f32 %v824, %v825
    %835 = vrot.lane.b32.xlu0 %v833, 64
    %v836 = vpop.permute.xlu0 %835
    %v838 = vadd.f32 %v832, %v836
    %v839 = vtanh.pop %v838
    %v840 = vmul.f32 %v831, %v839
    %v841 = vpack.c.bf16 %v723, %v723
    %843 = vrot.lane.b32.xlu0 %v841, 32
    %v844 = vpop.permute.xlu0 %843
    %v846 = vsel %vm466, %v844, 0
    %848 = vmatprep.subr.bf16.mxu0 0
    %849 = vmatpush1.bf16.msra.mxu0 0
    %850 = vmatprep.subr.bf16.mxu0 0
    %851 = vmatpush1.bf16.msra.mxu0 0
    %852 = vmatprep.subr.bf16.mxu0 0
    %853 = vmatpush1.bf16.msra.mxu0 0
    %854 = vmatprep.subr.bf16.mxu0 0
    %855 = vmatpush1.bf16.msra.mxu0 0
    %856 = vmatprep.subr.bf16.mxu0 0
    %857 = vmatpush1.bf16.msra.mxu0 0
    %858 = vmatprep.subr.bf16.mxu0 0
    %859 = vmatpush1.bf16.msra.mxu0 0
    %860 = vmatprep.subr.bf16.mxu0 0
    %861 = vmatpush1.bf16.msra.mxu0 %v463
    %862 = vmatprep.subr.bf16.mxu0 0
    %863 = vmatpush1.bf16.msra.mxu0 %v462
    %864 = vmatprep.subr.bf16.mxu0 0
    %865 = vmatpush2.bf16.msra.mxu0 0
    %866 = vmatprep.subr.bf16.mxu0 0
    %867 = vmatpush2.bf16.msra.mxu0 0
    %868 = vmatprep.subr.bf16.mxu0 0
    %869 = vmatpush2.bf16.msra.mxu0 0
    %870 = vmatprep.subr.bf16.mxu0 0
    %871 = vmatpush2.bf16.msra.mxu0 0
    %872 = vmatprep.subr.bf16.mxu0 0
    %873 = vmatpush2.bf16.msra.mxu0 0
    %874 = vmatprep.subr.bf16.mxu0 0
    %875 = vmatpush2.bf16.msra.mxu0 0
    %876 = vmatprep.subr.bf16.mxu0 0
    %877 = vmatpush2.bf16.msra.mxu0 0
    %878 = vmatprep.subr.bf16.mxu0 0
    %879 = vmatpush2.bf16.msra.mxu0 0
    %880 = vmatprep.mubr.bf16.mxu0 0
    %881 = vmatmul.mubr.bf16.gmra.mxu0 %v846
    %v882 = vpop.f32.mrf.mxu0
    %v883 = vadd.f32 0.0, %v882
    %v884 = vpop.f32.mrf.mxu0
    %v885 = vpop.f32.mrf.mxu0
    %v886 = vpop.f32.mrf.mxu0
    %887 = vdwg.mxu0
    %v888 = vadd.f32 %v766, %v883
    %v889 = vxor.u32 %v888, 2147483648
    %v890 = vmul.f32 %v889, 1.442695
    %v891 = vpow.pop %v890
    %v892 = vadd.f32 %v891, 1.0
    %v893 = vrcp.pop %v892
    %v894 = vmul.f32 1.0, %v893
    %v895 = vtanh.pop %v888
    %v896 = vmul.f32 %v894, %v717
    %898 = vrot.lane.b32.xlu0 %v895, 64
    %v899 = vpop.permute.xlu0 %898
    %v901 = vmul.f32 %v894, %v899
    %903 = vrot.lane.b32.xlu0 %v901, 32
    %v904 = vpop.permute.xlu0 %903
    %v906 = vadd.f32 %v896, %v904
    %v907 = vtanh.pop %v906
    %909 = vrot.lane.b32.xlu0 %v907, 64
    %v910 = vpop.permute.xlu0 %909
    %v912 = vmul.f32 %v894, %v910
    %v913 = vpack.c.bf16 %v840, %v840
    %915 = vrot.lane.b32.xlu0 %v913, 64
    %v916 = vpop.permute.xlu0 %915
    %v918 = vsel %vm300, %v916, 0
    %920 = vmatprep.subr.bf16.mxu0 0
    %921 = vmatpush1.bf16.msra.mxu0 0
    %922 = vmatprep.subr.bf16.mxu0 0
    %923 = vmatpush1.bf16.msra.mxu0 0
    %924 = vmatprep.subr.bf16.mxu0 0
    %925 = vmatpush1.bf16.msra.mxu0 0
    %926 = vmatprep.subr.bf16.mxu0 0
    %927 = vmatpush1.bf16.msra.mxu0 0
    %928 = vmatprep.subr.bf16.mxu0 0
    %929 = vmatpush1.bf16.msra.mxu0 %v295
    %930 = vmatprep.subr.bf16.mxu0 0
    %931 = vmatpush1.bf16.msra.mxu0 %v294
    %932 = vmatprep.subr.bf16.mxu0 0
    %933 = vmatpush1.bf16.msra.mxu0 %v293
    %934 = vmatprep.subr.bf16.mxu0 0
    %935 = vmatpush1.bf16.msra.mxu0 %v292
    %936 = vmatprep.subr.bf16.mxu0 0
    %937 = vmatpush2.bf16.msra.mxu0 0
    %938 = vmatprep.subr.bf16.mxu0 0
    %939 = vmatpush2.bf16.msra.mxu0 0
    %940 = vmatprep.subr.bf16.mxu0 0
    %941 = vmatpush2.bf16.msra.mxu0 0
    %942 = vmatprep.subr.bf16.mxu0 0
    %943 = vmatpush2.bf16.msra.mxu0 0
    %944 = vmatprep.subr.bf16.mxu0 0
    %945 = vmatpush2.bf16.msra.mxu0 0
    %946 = vmatprep.subr.bf16.mxu0 0
    %947 = vmatpush2.bf16.msra.mxu0 0
    %948 = vmatprep.subr.bf16.mxu0 0
    %949 = vmatpush2.bf16.msra.mxu0 0
    %950 = vmatprep.subr.bf16.mxu0 0
    %951 = vmatpush2.bf16.msra.mxu0 0
    %952 = vmatprep.mubr.bf16.mxu0 0
    %953 = vmatmul.mubr.bf16.gmra.mxu0 %v918
    %v954 = vpop.f32.mrf.mxu0
    %v955 = vadd.f32 %v271, %v954
    %v956 = vpop.f32.mrf.mxu0
    %v957 = vpop.f32.mrf.mxu0
    %v958 = vpop.f32.mrf.mxu0
    %959 = vdwg.mxu0
    %s960 = smul.u32 4, 2
    %s961 = smul.addr %s960, 8
    %s962 = scalar_lea.vmem [#allocation2], %s961
    %v963 = vld [vmem:[%s962] sm:$0xff]
    %v964 = vld [vmem:[%s962 + $0x8] sm:$0xff]
    %965 = vmatprep.subr.bf16.mxu0 0
    %966 = vmatpush1.bf16.msra.mxu0 0
    %967 = vmatprep.subr.bf16.mxu0 0
    %968 = vmatpush1.bf16.msra.mxu0 0
    %969 = vmatprep.subr.bf16.mxu0 0
    %970 = vmatpush1.bf16.msra.mxu0 0
    %971 = vmatprep.subr.bf16.mxu0 0
    %972 = vmatpush1.bf16.msra.mxu0 0
    %973 = vmatprep.subr.bf16.mxu0 %v380
    %974 = vmatpush1.bf16.msra.mxu0 %v379
    %975 = vmatprep.subr.bf16.mxu0 %v378
    %976 = vmatpush1.bf16.msra.mxu0 %v377
    %977 = vmatprep.subr.bf16.mxu0 %v376
    %978 = vmatpush1.bf16.msra.mxu0 %v375
    %979 = vmatprep.subr.bf16.mxu0 %v374
    %980 = vmatpush1.bf16.msra.mxu0 %v373
    %981 = vmatprep.subr.bf16.mxu0 0
    %982 = vmatpush2.bf16.msra.mxu0 0
    %983 = vmatprep.subr.bf16.mxu0 0
    %984 = vmatpush2.bf16.msra.mxu0 0
    %985 = vmatprep.subr.bf16.mxu0 0
    %986 = vmatpush2.bf16.msra.mxu0 0
    %987 = vmatprep.subr.bf16.mxu0 0
    %988 = vmatpush2.bf16.msra.mxu0 0
    %989 = vmatprep.subr.bf16.mxu0 0
    %990 = vmatpush2.bf16.msra.mxu0 0
    %991 = vmatprep.subr.bf16.mxu0 0
    %992 = vmatpush2.bf16.msra.mxu0 0
    %993 = vmatprep.subr.bf16.mxu0 0
    %994 = vmatpush2.bf16.msra.mxu0 0
    %995 = vmatprep.subr.bf16.mxu0 0
    %996 = vmatpush2.bf16.msra.mxu0 0
    %997 = vmatprep.mubr.bf16.mxu0 0
    %998 = vmatmul.mubr.bf16.gmra.mxu0 %v918
    %v999 = vpop.f32.mrf.mxu0
    %v1000 = vadd.f32 0.0, %v999
    %v1001 = vpop.f32.mrf.mxu0
    %v1002 = vadd.f32 0.0, %v1001
    %v1003 = vpop.f32.mrf.mxu0
    %v1004 = vpop.f32.mrf.mxu0
    %1005 = vdwg.mxu0
    %v1006 = vadd.f32 %v963, %v1000
    %v1007 = vadd.f32 %v964, %v1002
    %v1008 = vxor.u32 %v1006, 2147483648
    %v1009 = vmul.f32 %v1008, 1.442695
    %v1010 = vpow.pop %v1009
    %v1011 = vadd.f32 %v1010, 1.0
    %v1012 = vrcp.pop %v1011
    %v1013 = vmul.f32 1.0, %v1012
    %v1014 = vtanh.pop %v1007
    %v1015 = vxor.u32 %v1007, 2147483648
    %v1016 = vmul.f32 %v1015, 1.442695
    %v1017 = vpow.pop %v1016
    %v1018 = vadd.f32 %v1017, 1.0
    %v1019 = vrcp.pop %v1018
    %v1020 = vmul.f32 1.0, %v1019
    %v1021 = vmul.f32 %v1013, %v838
    %v1022 = vmul.f32 %v1013, %v1014
    %1024 = vrot.lane.b32.xlu0 %v1022, 64
    %v1025 = vpop.permute.xlu0 %1024
    %v1027 = vadd.f32 %v1021, %v1025
    %v1028 = vtanh.pop %v1027
    %v1029 = vmul.f32 %v1020, %v1028
    %v1030 = vpack.c.bf16 %v912, %v912
    %1032 = vrot.lane.b32.xlu0 %v1030, 32
    %v1033 = vpop.permute.xlu0 %1032
    %v1035 = vsel %vm466, %v1033, 0
    %1037 = vmatprep.subr.bf16.mxu0 0
    %1038 = vmatpush1.bf16.msra.mxu0 0
    %1039 = vmatprep.subr.bf16.mxu0 0
    %1040 = vmatpush1.bf16.msra.mxu0 0
    %1041 = vmatprep.subr.bf16.mxu0 0
    %1042 = vmatpush1.bf16.msra.mxu0 0
    %1043 = vmatprep.subr.bf16.mxu0 0
    %1044 = vmatpush1.bf16.msra.mxu0 0
    %1045 = vmatprep.subr.bf16.mxu0 0
    %1046 = vmatpush1.bf16.msra.mxu0 0
    %1047 = vmatprep.subr.bf16.mxu0 0
    %1048 = vmatpush1.bf16.msra.mxu0 0
    %1049 = vmatprep.subr.bf16.mxu0 0
    %1050 = vmatpush1.bf16.msra.mxu0 %v463
    %1051 = vmatprep.subr.bf16.mxu0 0
    %1052 = vmatpush1.bf16.msra.mxu0 %v462
    %1053 = vmatprep.subr.bf16.mxu0 0
    %1054 = vmatpush2.bf16.msra.mxu0 0
    %1055 = vmatprep.subr.bf16.mxu0 0
    %1056 = vmatpush2.bf16.msra.mxu0 0
    %1057 = vmatprep.subr.bf16.mxu0 0
    %1058 = vmatpush2.bf16.msra.mxu0 0
    %1059 = vmatprep.subr.bf16.mxu0 0
    %1060 = vmatpush2.bf16.msra.mxu0 0
    %1061 = vmatprep.subr.bf16.mxu0 0
    %1062 = vmatpush2.bf16.msra.mxu0 0
    %1063 = vmatprep.subr.bf16.mxu0 0
    %1064 = vmatpush2.bf16.msra.mxu0 0
    %1065 = vmatprep.subr.bf16.mxu0 0
    %1066 = vmatpush2.bf16.msra.mxu0 0
    %1067 = vmatprep.subr.bf16.mxu0 0
    %1068 = vmatpush2.bf16.msra.mxu0 0
    %1069 = vmatprep.mubr.bf16.mxu0 0
    %1070 = vmatmul.mubr.bf16.gmra.mxu0 %v1035
    %v1071 = vpop.f32.mrf.mxu0
    %v1072 = vadd.f32 0.0, %v1071
    %v1073 = vpop.f32.mrf.mxu0
    %v1074 = vpop.f32.mrf.mxu0
    %v1075 = vpop.f32.mrf.mxu0
    %1076 = vdwg.mxu0
    %v1077 = vadd.f32 %v955, %v1072
    %v1078 = vxor.u32 %v1077, 2147483648
    %v1079 = vmul.f32 %v1078, 1.442695
    %v1080 = vpow.pop %v1079
    %v1081 = vadd.f32 %v1080, 1.0
    %v1082 = vrcp.pop %v1081
    %v1083 = vmul.f32 1.0, %v1082
    %v1084 = vtanh.pop %v1077
    %v1085 = vmul.f32 %v1083, %v906
    %1087 = vrot.lane.b32.xlu0 %v1084, 64
    %v1088 = vpop.permute.xlu0 %1087
    %v1090 = vmul.f32 %v1083, %v1088
    %1092 = vrot.lane.b32.xlu0 %v1090, 32
    %v1093 = vpop.permute.xlu0 %1092
    %v1095 = vadd.f32 %v1085, %v1093
    %v1096 = vtanh.pop %v1095
    %1098 = vrot.lane.b32.xlu0 %v1096, 64
    %v1099 = vpop.permute.xlu0 %1098
    %v1101 = vmul.f32 %v1083, %v1099
    %v1102 = vpack.c.bf16 %v1029, %v1029
    %1104 = vrot.lane.b32.xlu0 %v1102, 64
    %v1105 = vpop.permute.xlu0 %1104
    %v1107 = vsel %vm300, %v1105, 0
    %1109 = vmatprep.subr.bf16.mxu0 0
    %1110 = vmatpush1.bf16.msra.mxu0 0
    %1111 = vmatprep.subr.bf16.mxu0 0
    %1112 = vmatpush1.bf16.msra.mxu0 0
    %1113 = vmatprep.subr.bf16.mxu0 0
    %1114 = vmatpush1.bf16.msra.mxu0 0
    %1115 = vmatprep.subr.bf16.mxu0 0
    %1116 = vmatpush1.bf16.msra.mxu0 0
    %1117 = vmatprep.subr.bf16.mxu0 0
    %1118 = vmatpush1.bf16.msra.mxu0 %v295
    %1119 = vmatprep.subr.bf16.mxu0 0
    %1120 = vmatpush1.bf16.msra.mxu0 %v294
    %1121 = vmatprep.subr.bf16.mxu0 0
    %1122 = vmatpush1.bf16.msra.mxu0 %v293
    %1123 = vmatprep.subr.bf16.mxu0 0
    %1124 = vmatpush1.bf16.msra.mxu0 %v292
    %1125 = vmatprep.subr.bf16.mxu0 0
    %1126 = vmatpush2.bf16.msra.mxu0 0
    %1127 = vmatprep.subr.bf16.mxu0 0
    %1128 = vmatpush2.bf16.msra.mxu0 0
    %1129 = vmatprep.subr.bf16.mxu0 0
    %1130 = vmatpush2.bf16.msra.mxu0 0
    %1131 = vmatprep.subr.bf16.mxu0 0
    %1132 = vmatpush2.bf16.msra.mxu0 0
    %1133 = vmatprep.subr.bf16.mxu0 0
    %1134 = vmatpush2.bf16.msra.mxu0 0
    %1135 = vmatprep.subr.bf16.mxu0 0
    %1136 = vmatpush2.bf16.msra.mxu0 0
    %1137 = vmatprep.subr.bf16.mxu0 0
    %1138 = vmatpush2.bf16.msra.mxu0 0
    %1139 = vmatprep.subr.bf16.mxu0 0
    %1140 = vmatpush2.bf16.msra.mxu0 0
    %1141 = vmatprep.mubr.bf16.mxu0 0
    %1142 = vmatmul.mubr.bf16.gmra.mxu0 %v1107
    %v1143 = vpop.f32.mrf.mxu0
    %v1144 = vadd.f32 %v271, %v1143
    %v1145 = vpop.f32.mrf.mxu0
    %v1146 = vpop.f32.mrf.mxu0
    %v1147 = vpop.f32.mrf.mxu0
    %1148 = vdwg.mxu0
    %s1149 = smul.u32 5, 2
    %s1150 = smul.addr %s1149, 8
    %s1151 = scalar_lea.vmem [#allocation2], %s1150
    %v1152 = vld [vmem:[%s1151] sm:$0xff]
    %v1153 = vld [vmem:[%s1151 + $0x8] sm:$0xff]
    %1154 = vmatprep.subr.bf16.mxu0 0
    %1155 = vmatpush1.bf16.msra.mxu0 0
    %1156 = vmatprep.subr.bf16.mxu0 0
    %1157 = vmatpush1.bf16.msra.mxu0 0
    %1158 = vmatprep.subr.bf16.mxu0 0
    %1159 = vmatpush1.bf16.msra.mxu0 0
    %1160 = vmatprep.subr.bf16.mxu0 0
    %1161 = vmatpush1.bf16.msra.mxu0 0
    %1162 = vmatprep.subr.bf16.mxu0 %v380
    %1163 = vmatpush1.bf16.msra.mxu0 %v379
    %1164 = vmatprep.subr.bf16.mxu0 %v378
    %1165 = vmatpush1.bf16.msra.mxu0 %v377
    %1166 = vmatprep.subr.bf16.mxu0 %v376
    %1167 = vmatpush1.bf16.msra.mxu0 %v375
    %1168 = vmatprep.subr.bf16.mxu0 %v374
    %1169 = vmatpush1.bf16.msra.mxu0 %v373
    %1170 = vmatprep.subr.bf16.mxu0 0
    %1171 = vmatpush2.bf16.msra.mxu0 0
    %1172 = vmatprep.subr.bf16.mxu0 0
    %1173 = vmatpush2.bf16.msra.mxu0 0
    %1174 = vmatprep.subr.bf16.mxu0 0
    %1175 = vmatpush2.bf16.msra.mxu0 0
    %1176 = vmatprep.subr.bf16.mxu0 0
    %1177 = vmatpush2.bf16.msra.mxu0 0
    %1178 = vmatprep.subr.bf16.mxu0 0
    %1179 = vmatpush2.bf16.msra.mxu0 0
    %1180 = vmatprep.subr.bf16.mxu0 0
    %1181 = vmatpush2.bf16.msra.mxu0 0
    %1182 = vmatprep.subr.bf16.mxu0 0
    %1183 = vmatpush2.bf16.msra.mxu0 0
    %1184 = vmatprep.subr.bf16.mxu0 0
    %1185 = vmatpush2.bf16.msra.mxu0 0
    %1186 = vmatprep.mubr.bf16.mxu0 0
    %1187 = vmatmul.mubr.bf16.gmra.mxu0 %v1107
    %v1188 = vpop.f32.mrf.mxu0
    %v1189 = vadd.f32 0.0, %v1188
    %v1190 = vpop.f32.mrf.mxu0
    %v1191 = vadd.f32 0.0, %v1190
    %v1192 = vpop.f32.mrf.mxu0
    %v1193 = vpop.f32.mrf.mxu0
    %1194 = vdwg.mxu0
    %v1195 = vadd.f32 %v1152, %v1189
    %v1196 = vadd.f32 %v1153, %v1191
    %v1197 = vxor.u32 %v1195, 2147483648
    %v1198 = vmul.f32 %v1197, 1.442695
    %v1199 = vpow.pop %v1198
    %v1200 = vadd.f32 %v1199, 1.0
    %v1201 = vrcp.pop %v1200
    %v1202 = vmul.f32 1.0, %v1201
    %v1203 = vtanh.pop %v1196
    %v1204 = vxor.u32 %v1196, 2147483648
    %v1205 = vmul.f32 %v1204, 1.442695
    %v1206 = vpow.pop %v1205
    %v1207 = vadd.f32 %v1206, 1.0
    %v1208 = vrcp.pop %v1207
    %v1209 = vmul.f32 1.0, %v1208
    %v1210 = vmul.f32 %v1202, %v1027
    %v1211 = vmul.f32 %v1202, %v1203
    %1213 = vrot.lane.b32.xlu0 %v1211, 64
    %v1214 = vpop.permute.xlu0 %1213
    %v1216 = vadd.f32 %v1210, %v1214
    %v1217 = vtanh.pop %v1216
    %v1218 = vmul.f32 %v1209, %v1217
    %v1219 = vpack.c.bf16 %v1101, %v1101
    %1221 = vrot.lane.b32.xlu0 %v1219, 32
    %v1222 = vpop.permute.xlu0 %1221
    %v1224 = vsel %vm466, %v1222, 0
    %1226 = vmatprep.subr.bf16.mxu0 0
    %1227 = vmatpush1.bf16.msra.mxu0 0
    %1228 = vmatprep.subr.bf16.mxu0 0
    %1229 = vmatpush1.bf16.msra.mxu0 0
    %1230 = vmatprep.subr.bf16.mxu0 0
    %1231 = vmatpush1.bf16.msra.mxu0 0
    %1232 = vmatprep.subr.bf16.mxu0 0
    %1233 = vmatpush1.bf16.msra.mxu0 0
    %1234 = vmatprep.subr.bf16.mxu0 0
    %1235 = vmatpush1.bf16.msra.mxu0 0
    %1236 = vmatprep.subr.bf16.mxu0 0
    %1237 = vmatpush1.bf16.msra.mxu0 0
    %1238 = vmatprep.subr.bf16.mxu0 0
    %1239 = vmatpush1.bf16.msra.mxu0 %v463
    %1240 = vmatprep.subr.bf16.mxu0 0
    %1241 = vmatpush1.bf16.msra.mxu0 %v462
    %1242 = vmatprep.subr.bf16.mxu0 0
    %1243 = vmatpush2.bf16.msra.mxu0 0
    %1244 = vmatprep.subr.bf16.mxu0 0
    %1245 = vmatpush2.bf16.msra.mxu0 0
    %1246 = vmatprep.subr.bf16.mxu0 0
    %1247 = vmatpush2.bf16.msra.mxu0 0
    %1248 = vmatprep.subr.bf16.mxu0 0
    %1249 = vmatpush2.bf16.msra.mxu0 0
    %1250 = vmatprep.subr.bf16.mxu0 0
    %1251 = vmatpush2.bf16.msra.mxu0 0
    %1252 = vmatprep.subr.bf16.mxu0 0
    %1253 = vmatpush2.bf16.msra.mxu0 0
    %1254 = vmatprep.subr.bf16.mxu0 0
    %1255 = vmatpush2.bf16.msra.mxu0 0
    %1256 = vmatprep.subr.bf16.mxu0 0
    %1257 = vmatpush2.bf16.msra.mxu0 0
    %1258 = vmatprep.mubr.bf16.mxu0 0
    %1259 = vmatmul.mubr.bf16.gmra.mxu0 %v1224
    %v1260 = vpop.f32.mrf.mxu0
    %v1261 = vadd.f32 0.0, %v1260
    %v1262 = vpop.f32.mrf.mxu0
    %v1263 = vpop.f32.mrf.mxu0
    %v1264 = vpop.f32.mrf.mxu0
    %1265 = vdwg.mxu0
    %v1266 = vadd.f32 %v1144, %v1261
    %v1267 = vxor.u32 %v1266, 2147483648
    %v1268 = vmul.f32 %v1267, 1.442695
    %v1269 = vpow.pop %v1268
    %v1270 = vadd.f32 %v1269, 1.0
    %v1271 = vrcp.pop %v1270
    %v1272 = vmul.f32 1.0, %v1271
    %v1273 = vtanh.pop %v1266
    %v1274 = vmul.f32 %v1272, %v1095
    %1276 = vrot.lane.b32.xlu0 %v1273, 64
    %v1277 = vpop.permute.xlu0 %1276
    %v1279 = vmul.f32 %v1272, %v1277
    %1281 = vrot.lane.b32.xlu0 %v1279, 32
    %v1282 = vpop.permute.xlu0 %1281
    %v1284 = vadd.f32 %v1274, %v1282
    %v1285 = vtanh.pop %v1284
    %1287 = vrot.lane.b32.xlu0 %v1285, 64
    %v1288 = vpop.permute.xlu0 %1287
    %v1290 = vmul.f32 %v1272, %v1288
    %v1291 = vpack.c.bf16 %v1218, %v1218
    %1293 = vrot.lane.b32.xlu0 %v1291, 64
    %v1294 = vpop.permute.xlu0 %1293
    %v1296 = vsel %vm300, %v1294, 0
    %1298 = vmatprep.subr.bf16.mxu0 0
    %1299 = vmatpush1.bf16.msra.mxu0 0
    %1300 = vmatprep.subr.bf16.mxu0 0
    %1301 = vmatpush1.bf16.msra.mxu0 0
    %1302 = vmatprep.subr.bf16.mxu0 0
    %1303 = vmatpush1.bf16.msra.mxu0 0
    %1304 = vmatprep.subr.bf16.mxu0 0
    %1305 = vmatpush1.bf16.msra.mxu0 0
    %1306 = vmatprep.subr.bf16.mxu0 0
    %1307 = vmatpush1.bf16.msra.mxu0 %v295
    %1308 = vmatprep.subr.bf16.mxu0 0
    %1309 = vmatpush1.bf16.msra.mxu0 %v294
    %1310 = vmatprep.subr.bf16.mxu0 0
    %1311 = vmatpush1.bf16.msra.mxu0 %v293
    %1312 = vmatprep.subr.bf16.mxu0 0
    %1313 = vmatpush1.bf16.msra.mxu0 %v292
    %1314 = vmatprep.subr.bf16.mxu0 0
    %1315 = vmatpush2.bf16.msra.mxu0 0
    %1316 = vmatprep.subr.bf16.mxu0 0
    %1317 = vmatpush2.bf16.msra.mxu0 0
    %1318 = vmatprep.subr.bf16.mxu0 0
    %1319 = vmatpush2.bf16.msra.mxu0 0
    %1320 = vmatprep.subr.bf16.mxu0 0
    %1321 = vmatpush2.bf16.msra.mxu0 0
    %1322 = vmatprep.subr.bf16.mxu0 0
    %1323 = vmatpush2.bf16.msra.mxu0 0
    %1324 = vmatprep.subr.bf16.mxu0 0
    %1325 = vmatpush2.bf16.msra.mxu0 0
    %1326 = vmatprep.subr.bf16.mxu0 0
    %1327 = vmatpush2.bf16.msra.mxu0 0
    %1328 = vmatprep.subr.bf16.mxu0 0
    %1329 = vmatpush2.bf16.msra.mxu0 0
    %1330 = vmatprep.mubr.bf16.mxu0 0
    %1331 = vmatmul.mubr.bf16.gmra.mxu0 %v1296
    %v1332 = vpop.f32.mrf.mxu0
    %v1333 = vadd.f32 %v271, %v1332
    %v1334 = vpop.f32.mrf.mxu0
    %v1335 = vpop.f32.mrf.mxu0
    %v1336 = vpop.f32.mrf.mxu0
    %1337 = vdwg.mxu0
    %s1338 = smul.u32 6, 2
    %s1339 = smul.addr %s1338, 8
    %s1340 = scalar_lea.vmem [#allocation2], %s1339
    %v1341 = vld [vmem:[%s1340] sm:$0xff]
    %v1342 = vld [vmem:[%s1340 + $0x8] sm:$0xff]
    %1343 = vmatprep.subr.bf16.mxu0 0
    %1344 = vmatpush1.bf16.msra.mxu0 0
    %1345 = vmatprep.subr.bf16.mxu0 0
    %1346 = vmatpush1.bf16.msra.mxu0 0
    %1347 = vmatprep.subr.bf16.mxu0 0
    %1348 = vmatpush1.bf16.msra.mxu0 0
    %1349 = vmatprep.subr.bf16.mxu0 0
    %1350 = vmatpush1.bf16.msra.mxu0 0
    %1351 = vmatprep.subr.bf16.mxu0 %v380
    %1352 = vmatpush1.bf16.msra.mxu0 %v379
    %1353 = vmatprep.subr.bf16.mxu0 %v378
    %1354 = vmatpush1.bf16.msra.mxu0 %v377
    %1355 = vmatprep.subr.bf16.mxu0 %v376
    %1356 = vmatpush1.bf16.msra.mxu0 %v375
    %1357 = vmatprep.subr.bf16.mxu0 %v374
    %1358 = vmatpush1.bf16.msra.mxu0 %v373
    %1359 = vmatprep.subr.bf16.mxu0 0
    %1360 = vmatpush2.bf16.msra.mxu0 0
    %1361 = vmatprep.subr.bf16.mxu0 0
    %1362 = vmatpush2.bf16.msra.mxu0 0
    %1363 = vmatprep.subr.bf16.mxu0 0
    %1364 = vmatpush2.bf16.msra.mxu0 0
    %1365 = vmatprep.subr.bf16.mxu0 0
    %1366 = vmatpush2.bf16.msra.mxu0 0
    %1367 = vmatprep.subr.bf16.mxu0 0
    %1368 = vmatpush2.bf16.msra.mxu0 0
    %1369 = vmatprep.subr.bf16.mxu0 0
    %1370 = vmatpush2.bf16.msra.mxu0 0
    %1371 = vmatprep.subr.bf16.mxu0 0
    %1372 = vmatpush2.bf16.msra.mxu0 0
    %1373 = vmatprep.subr.bf16.mxu0 0
    %1374 = vmatpush2.bf16.msra.mxu0 0
    %1375 = vmatprep.mubr.bf16.mxu0 0
    %1376 = vmatmul.mubr.bf16.gmra.mxu0 %v1296
    %v1377 = vpop.f32.mrf.mxu0
    %v1378 = vadd.f32 0.0, %v1377
    %v1379 = vpop.f32.mrf.mxu0
    %v1380 = vadd.f32 0.0, %v1379
    %v1381 = vpop.f32.mrf.mxu0
    %v1382 = vpop.f32.mrf.mxu0
    %1383 = vdwg.mxu0
    %v1384 = vadd.f32 %v1341, %v1378
    %v1385 = vadd.f32 %v1342, %v1380
    %v1386 = vxor.u32 %v1384, 2147483648
    %v1387 = vmul.f32 %v1386, 1.442695
    %v1388 = vpow.pop %v1387
    %v1389 = vadd.f32 %v1388, 1.0
    %v1390 = vrcp.pop %v1389
    %v1391 = vmul.f32 1.0, %v1390
    %v1392 = vtanh.pop %v1385
    %v1393 = vxor.u32 %v1385, 2147483648
    %v1394 = vmul.f32 %v1393, 1.442695
    %v1395 = vpow.pop %v1394
    %v1396 = vadd.f32 %v1395, 1.0
    %v1397 = vrcp.pop %v1396
    %v1398 = vmul.f32 1.0, %v1397
    %v1399 = vmul.f32 %v1391, %v1216
    %v1400 = vmul.f32 %v1391, %v1392
    %1402 = vrot.lane.b32.xlu0 %v1400, 64
    %v1403 = vpop.permute.xlu0 %1402
    %v1405 = vadd.f32 %v1399, %v1403
    %v1406 = vtanh.pop %v1405
    %v1407 = vmul.f32 %v1398, %v1406
    %v1408 = vpack.c.bf16 %v1290, %v1290
    %1410 = vrot.lane.b32.xlu0 %v1408, 32
    %v1411 = vpop.permute.xlu0 %1410
    %v1413 = vsel %vm466, %v1411, 0
    %1415 = vmatprep.subr.bf16.mxu0 0
    %1416 = vmatpush1.bf16.msra.mxu0 0
    %1417 = vmatprep.subr.bf16.mxu0 0
    %1418 = vmatpush1.bf16.msra.mxu0 0
    %1419 = vmatprep.subr.bf16.mxu0 0
    %1420 = vmatpush1.bf16.msra.mxu0 0
    %1421 = vmatprep.subr.bf16.mxu0 0
    %1422 = vmatpush1.bf16.msra.mxu0 0
    %1423 = vmatprep.subr.bf16.mxu0 0
    %1424 = vmatpush1.bf16.msra.mxu0 0
    %1425 = vmatprep.subr.bf16.mxu0 0
    %1426 = vmatpush1.bf16.msra.mxu0 0
    %1427 = vmatprep.subr.bf16.mxu0 0
    %1428 = vmatpush1.bf16.msra.mxu0 %v463
    %1429 = vmatprep.subr.bf16.mxu0 0
    %1430 = vmatpush1.bf16.msra.mxu0 %v462
    %1431 = vmatprep.subr.bf16.mxu0 0
    %1432 = vmatpush2.bf16.msra.mxu0 0
    %1433 = vmatprep.subr.bf16.mxu0 0
    %1434 = vmatpush2.bf16.msra.mxu0 0
    %1435 = vmatprep.subr.bf16.mxu0 0
    %1436 = vmatpush2.bf16.msra.mxu0 0
    %1437 = vmatprep.subr.bf16.mxu0 0
    %1438 = vmatpush2.bf16.msra.mxu0 0
    %1439 = vmatprep.subr.bf16.mxu0 0
    %1440 = vmatpush2.bf16.msra.mxu0 0
    %1441 = vmatprep.subr.bf16.mxu0 0
    %1442 = vmatpush2.bf16.msra.mxu0 0
    %1443 = vmatprep.subr.bf16.mxu0 0
    %1444 = vmatpush2.bf16.msra.mxu0 0
    %1445 = vmatprep.subr.bf16.mxu0 0
    %1446 = vmatpush2.bf16.msra.mxu0 0
    %1447 = vmatprep.mubr.bf16.mxu0 0
    %1448 = vmatmul.mubr.bf16.gmra.mxu0 %v1413
    %v1449 = vpop.f32.mrf.mxu0
    %v1450 = vadd.f32 0.0, %v1449
    %v1451 = vpop.f32.mrf.mxu0
    %v1452 = vpop.f32.mrf.mxu0
    %v1453 = vpop.f32.mrf.mxu0
    %1454 = vdwg.mxu0
    %v1455 = vadd.f32 %v1333, %v1450
    %v1456 = vxor.u32 %v1455, 2147483648
    %v1457 = vmul.f32 %v1456, 1.442695
    %v1458 = vpow.pop %v1457
    %v1459 = vadd.f32 %v1458, 1.0
    %v1460 = vrcp.pop %v1459
    %v1461 = vmul.f32 1.0, %v1460
    %v1462 = vtanh.pop %v1455
    %v1463 = vmul.f32 %v1461, %v1284
    %1465 = vrot.lane.b32.xlu0 %v1462, 64
    %v1466 = vpop.permute.xlu0 %1465
    %v1468 = vmul.f32 %v1461, %v1466
    %1470 = vrot.lane.b32.xlu0 %v1468, 32
    %v1471 = vpop.permute.xlu0 %1470
    %v1473 = vadd.f32 %v1463, %v1471
    %v1474 = vtanh.pop %v1473
    %1476 = vrot.lane.b32.xlu0 %v1474, 64
    %v1477 = vpop.permute.xlu0 %1476
    %v1479 = vmul.f32 %v1461, %v1477
    %v1480 = vpack.c.bf16 %v1407, %v1407
    %1482 = vrot.lane.b32.xlu0 %v1480, 64
    %v1483 = vpop.permute.xlu0 %1482
    %v1485 = vsel %vm300, %v1483, 0
    %1487 = vmatprep.subr.bf16.mxu0 0
    %1488 = vmatpush1.bf16.msra.mxu0 0
    %1489 = vmatprep.subr.bf16.mxu0 0
    %1490 = vmatpush1.bf16.msra.mxu0 0
    %1491 = vmatprep.subr.bf16.mxu0 0
    %1492 = vmatpush1.bf16.msra.mxu0 0
    %1493 = vmatprep.subr.bf16.mxu0 0
    %1494 = vmatpush1.bf16.msra.mxu0 0
    %1495 = vmatprep.subr.bf16.mxu0 0
    %1496 = vmatpush1.bf16.msra.mxu0 %v295
    %1497 = vmatprep.subr.bf16.mxu0 0
    %1498 = vmatpush1.bf16.msra.mxu0 %v294
    %1499 = vmatprep.subr.bf16.mxu0 0
    %1500 = vmatpush1.bf16.msra.mxu0 %v293
    %1501 = vmatprep.subr.bf16.mxu0 0
    %1502 = vmatpush1.bf16.msra.mxu0 %v292
    %1503 = vmatprep.subr.bf16.mxu0 0
    %1504 = vmatpush2.bf16.msra.mxu0 0
    %1505 = vmatprep.subr.bf16.mxu0 0
    %1506 = vmatpush2.bf16.msra.mxu0 0
    %1507 = vmatprep.subr.bf16.mxu0 0
    %1508 = vmatpush2.bf16.msra.mxu0 0
    %1509 = vmatprep.subr.bf16.mxu0 0
    %1510 = vmatpush2.bf16.msra.mxu0 0
    %1511 = vmatprep.subr.bf16.mxu0 0
    %1512 = vmatpush2.bf16.msra.mxu0 0
    %1513 = vmatprep.subr.bf16.mxu0 0
    %1514 = vmatpush2.bf16.msra.mxu0 0
    %1515 = vmatprep.subr.bf16.mxu0 0
    %1516 = vmatpush2.bf16.msra.mxu0 0
    %1517 = vmatprep.subr.bf16.mxu0 0
    %1518 = vmatpush2.bf16.msra.mxu0 0
    %1519 = vmatprep.mubr.bf16.mxu0 0
    %1520 = vmatmul.mubr.bf16.gmra.mxu0 %v1485
    %v1521 = vpop.f32.mrf.mxu0
    %v1522 = vadd.f32 %v271, %v1521
    %v1523 = vpop.f32.mrf.mxu0
    %v1524 = vpop.f32.mrf.mxu0
    %v1525 = vpop.f32.mrf.mxu0
    %1526 = vdwg.mxu0
    %s1527 = smul.u32 7, 2
    %s1528 = smul.addr %s1527, 8
    %s1529 = scalar_lea.vmem [#allocation2], %s1528
    %v1530 = vld [vmem:[%s1529] sm:$0xff]
    %v1531 = vld [vmem:[%s1529 + $0x8] sm:$0xff]
    %1532 = vmatprep.subr.bf16.mxu0 0
    %1533 = vmatpush1.bf16.msra.mxu0 0
    %1534 = vmatprep.subr.bf16.mxu0 0
    %1535 = vmatpush1.bf16.msra.mxu0 0
    %1536 = vmatprep.subr.bf16.mxu0 0
    %1537 = vmatpush1.bf16.msra.mxu0 0
    %1538 = vmatprep.subr.bf16.mxu0 0
    %1539 = vmatpush1.bf16.msra.mxu0 0
    %1540 = vmatprep.subr.bf16.mxu0 %v380
    %1541 = vmatpush1.bf16.msra.mxu0 %v379
    %1542 = vmatprep.subr.bf16.mxu0 %v378
    %1543 = vmatpush1.bf16.msra.mxu0 %v377
    %1544 = vmatprep.subr.bf16.mxu0 %v376
    %1545 = vmatpush1.bf16.msra.mxu0 %v375
    %1546 = vmatprep.subr.bf16.mxu0 %v374
    %1547 = vmatpush1.bf16.msra.mxu0 %v373
    %1548 = vmatprep.subr.bf16.mxu0 0
    %1549 = vmatpush2.bf16.msra.mxu0 0
    %1550 = vmatprep.subr.bf16.mxu0 0
    %1551 = vmatpush2.bf16.msra.mxu0 0
    %1552 = vmatprep.subr.bf16.mxu0 0
    %1553 = vmatpush2.bf16.msra.mxu0 0
    %1554 = vmatprep.subr.bf16.mxu0 0
    %1555 = vmatpush2.bf16.msra.mxu0 0
    %1556 = vmatprep.subr.bf16.mxu0 0
    %1557 = vmatpush2.bf16.msra.mxu0 0
    %1558 = vmatprep.subr.bf16.mxu0 0
    %1559 = vmatpush2.bf16.msra.mxu0 0
    %1560 = vmatprep.subr.bf16.mxu0 0
    %1561 = vmatpush2.bf16.msra.mxu0 0
    %1562 = vmatprep.subr.bf16.mxu0 0
    %1563 = vmatpush2.bf16.msra.mxu0 0
    %1564 = vmatprep.mubr.bf16.mxu0 0
    %1565 = vmatmul.mubr.bf16.gmra.mxu0 %v1485
    %v1566 = vpop.f32.mrf.mxu0
    %v1567 = vadd.f32 0.0, %v1566
    %v1568 = vpop.f32.mrf.mxu0
    %v1569 = vadd.f32 0.0, %v1568
    %v1570 = vpop.f32.mrf.mxu0
    %v1571 = vpop.f32.mrf.mxu0
    %1572 = vdwg.mxu0
    %v1573 = vadd.f32 %v1530, %v1567
    %v1574 = vadd.f32 %v1531, %v1569
    %v1575 = vxor.u32 %v1573, 2147483648
    %v1576 = vmul.f32 %v1575, 1.442695
    %v1577 = vpow.pop %v1576
    %v1578 = vadd.f32 %v1577, 1.0
    %v1579 = vrcp.pop %v1578
    %v1580 = vmul.f32 1.0, %v1579
    %v1581 = vtanh.pop %v1574
    %v1582 = vxor.u32 %v1574, 2147483648
    %v1583 = vmul.f32 %v1582, 1.442695
    %v1584 = vpow.pop %v1583
    %v1585 = vadd.f32 %v1584, 1.0
    %v1586 = vrcp.pop %v1585
    %v1587 = vmul.f32 1.0, %v1586
    %v1588 = vmul.f32 %v1580, %v1405
    %v1589 = vmul.f32 %v1580, %v1581
    %1591 = vrot.lane.b32.xlu0 %v1589, 64
    %v1592 = vpop.permute.xlu0 %1591
    %v1594 = vadd.f32 %v1588, %v1592
    %v1595 = vtanh.pop %v1594
    %v1596 = vmul.f32 %v1587, %v1595
    %v1597 = vpack.c.bf16 %v1479, %v1479
    %1599 = vrot.lane.b32.xlu0 %v1597, 32
    %v1600 = vpop.permute.xlu0 %1599
    %v1602 = vsel %vm466, %v1600, 0
    %1604 = vmatprep.subr.bf16.mxu0 0
    %1605 = vmatpush1.bf16.msra.mxu0 0
    %1606 = vmatprep.subr.bf16.mxu0 0
    %1607 = vmatpush1.bf16.msra.mxu0 0
    %1608 = vmatprep.subr.bf16.mxu0 0
    %1609 = vmatpush1.bf16.msra.mxu0 0
    %1610 = vmatprep.subr.bf16.mxu0 0
    %1611 = vmatpush1.bf16.msra.mxu0 0
    %1612 = vmatprep.subr.bf16.mxu0 0
    %1613 = vmatpush1.bf16.msra.mxu0 0
    %1614 = vmatprep.subr.bf16.mxu0 0
    %1615 = vmatpush1.bf16.msra.mxu0 0
    %1616 = vmatprep.subr.bf16.mxu0 0
    %1617 = vmatpush1.bf16.msra.mxu0 %v463
    %1618 = vmatprep.subr.bf16.mxu0 0
    %1619 = vmatpush1.bf16.msra.mxu0 %v462
    %1620 = vmatprep.subr.bf16.mxu0 0
    %1621 = vmatpush2.bf16.msra.mxu0 0
    %1622 = vmatprep.subr.bf16.mxu0 0
    %1623 = vmatpush2.bf16.msra.mxu0 0
    %1624 = vmatprep.subr.bf16.mxu0 0
    %1625 = vmatpush2.bf16.msra.mxu0 0
    %1626 = vmatprep.subr.bf16.mxu0 0
    %1627 = vmatpush2.bf16.msra.mxu0 0
    %1628 = vmatprep.subr.bf16.mxu0 0
    %1629 = vmatpush2.bf16.msra.mxu0 0
    %1630 = vmatprep.subr.bf16.mxu0 0
    %1631 = vmatpush2.bf16.msra.mxu0 0
    %1632 = vmatprep.subr.bf16.mxu0 0
    %1633 = vmatpush2.bf16.msra.mxu0 0
    %1634 = vmatprep.subr.bf16.mxu0 0
    %1635 = vmatpush2.bf16.msra.mxu0 0
    %1636 = vmatprep.mubr.bf16.mxu0 0
    %1637 = vmatmul.mubr.bf16.gmra.mxu0 %v1602
    %v1638 = vpop.f32.mrf.mxu0
    %v1639 = vadd.f32 0.0, %v1638
    %v1640 = vpop.f32.mrf.mxu0
    %v1641 = vpop.f32.mrf.mxu0
    %v1642 = vpop.f32.mrf.mxu0
    %1643 = vdwg.mxu0
    %v1644 = vadd.f32 %v1522, %v1639
    %v1645 = vxor.u32 %v1644, 2147483648
    %v1646 = vmul.f32 %v1645, 1.442695
    %v1647 = vpow.pop %v1646
    %v1648 = vadd.f32 %v1647, 1.0
    %v1649 = vrcp.pop %v1648
    %v1650 = vmul.f32 1.0, %v1649
    %v1651 = vtanh.pop %v1644
    %v1652 = vmul.f32 %v1650, %v1473
    %1654 = vrot.lane.b32.xlu0 %v1651, 64
    %v1655 = vpop.permute.xlu0 %1654
    %v1657 = vmul.f32 %v1650, %v1655
    %1659 = vrot.lane.b32.xlu0 %v1657, 32
    %v1660 = vpop.permute.xlu0 %1659
    %v1662 = vadd.f32 %v1652, %v1660
    %v1663 = vtanh.pop %v1662
    %1665 = vrot.lane.b32.xlu0 %v1663, 64
    %v1666 = vpop.permute.xlu0 %1665
    %v1668 = vmul.f32 %v1650, %v1666
    %v1669 = vpack.c.bf16 %v1596, %v1596
    %1671 = vrot.lane.b32.xlu0 %v1669, 64
    %v1672 = vpop.permute.xlu0 %1671
    %v1674 = vsel %vm300, %v1672, 0
    %1676 = vmatprep.subr.bf16.mxu0 0
    %1677 = vmatpush1.bf16.msra.mxu0 0
    %1678 = vmatprep.subr.bf16.mxu0 0
    %1679 = vmatpush1.bf16.msra.mxu0 0
    %1680 = vmatprep.subr.bf16.mxu0 0
    %1681 = vmatpush1.bf16.msra.mxu0 0
    %1682 = vmatprep.subr.bf16.mxu0 0
    %1683 = vmatpush1.bf16.msra.mxu0 0
    %1684 = vmatprep.subr.bf16.mxu0 0
    %1685 = vmatpush1.bf16.msra.mxu0 %v295
    %1686 = vmatprep.subr.bf16.mxu0 0
    %1687 = vmatpush1.bf16.msra.mxu0 %v294
    %1688 = vmatprep.subr.bf16.mxu0 0
    %1689 = vmatpush1.bf16.msra.mxu0 %v293
    %1690 = vmatprep.subr.bf16.mxu0 0
    %1691 = vmatpush1.bf16.msra.mxu0 %v292
    %1692 = vmatprep.subr.bf16.mxu0 0
    %1693 = vmatpush2.bf16.msra.mxu0 0
    %1694 = vmatprep.subr.bf16.mxu0 0
    %1695 = vmatpush2.bf16.msra.mxu0 0
    %1696 = vmatprep.subr.bf16.mxu0 0
    %1697 = vmatpush2.bf16.msra.mxu0 0
    %1698 = vmatprep.subr.bf16.mxu0 0
    %1699 = vmatpush2.bf16.msra.mxu0 0
    %1700 = vmatprep.subr.bf16.mxu0 0
    %1701 = vmatpush2.bf16.msra.mxu0 0
    %1702 = vmatprep.subr.bf16.mxu0 0
    %1703 = vmatpush2.bf16.msra.mxu0 0
    %1704 = vmatprep.subr.bf16.mxu0 0
    %1705 = vmatpush2.bf16.msra.mxu0 0
    %1706 = vmatprep.subr.bf16.mxu0 0
    %1707 = vmatpush2.bf16.msra.mxu0 0
    %1708 = vmatprep.mubr.bf16.mxu0 0
    %1709 = vmatmul.mubr.bf16.gmra.mxu0 %v1674
    %v1710 = vpop.f32.mrf.mxu0
    %v1711 = vadd.f32 %v271, %v1710
    %v1712 = vpop.f32.mrf.mxu0
    %v1713 = vpop.f32.mrf.mxu0
    %v1714 = vpop.f32.mrf.mxu0
    %1715 = vdwg.mxu0
    %v1716 = vpack.c.bf16 %v1668, %v1668
    %1718 = vrot.lane.b32.xlu0 %v1716, 32
    %v1719 = vpop.permute.xlu0 %1718
    %v1721 = vsel %vm466, %v1719, 0
    %1723 = vmatprep.subr.bf16.mxu0 0
    %1724 = vmatpush1.bf16.msra.mxu0 0
    %1725 = vmatprep.subr.bf16.mxu0 0
    %1726 = vmatpush1.bf16.msra.mxu0 0
    %1727 = vmatprep.subr.bf16.mxu0 0
    %1728 = vmatpush1.bf16.msra.mxu0 0
    %1729 = vmatprep.subr.bf16.mxu0 0
    %1730 = vmatpush1.bf16.msra.mxu0 0
    %1731 = vmatprep.subr.bf16.mxu0 0
    %1732 = vmatpush1.bf16.msra.mxu0 0
    %1733 = vmatprep.subr.bf16.mxu0 0
    %1734 = vmatpush1.bf16.msra.mxu0 0
    %1735 = vmatprep.subr.bf16.mxu0 0
    %1736 = vmatpush1.bf16.msra.mxu0 %v463
    %1737 = vmatprep.subr.bf16.mxu0 0
    %1738 = vmatpush1.bf16.msra.mxu0 %v462
    %1739 = vmatprep.subr.bf16.mxu0 0
    %1740 = vmatpush2.bf16.msra.mxu0 0
    %1741 = vmatprep.subr.bf16.mxu0 0
    %1742 = vmatpush2.bf16.msra.mxu0 0
    %1743 = vmatprep.subr.bf16.mxu0 0
    %1744 = vmatpush2.bf16.msra.mxu0 0
    %1745 = vmatprep.subr.bf16.mxu0 0
    %1746 = vmatpush2.bf16.msra.mxu0 0
    %1747 = vmatprep.subr.bf16.mxu0 0
    %1748 = vmatpush2.bf16.msra.mxu0 0
    %1749 = vmatprep.subr.bf16.mxu0 0
    %1750 = vmatpush2.bf16.msra.mxu0 0
    %1751 = vmatprep.subr.bf16.mxu0 0
    %1752 = vmatpush2.bf16.msra.mxu0 0
    %1753 = vmatprep.subr.bf16.mxu0 0
    %1754 = vmatpush2.bf16.msra.mxu0 0
    %1755 = vmatprep.mubr.bf16.mxu0 0
    %1756 = vmatmul.mubr.bf16.gmra.mxu0 %v1721
    %v1757 = vpop.f32.mrf.mxu0
    %v1758 = vadd.f32 0.0, %v1757
    %v1759 = vpop.f32.mrf.mxu0
    %v1760 = vpop.f32.mrf.mxu0
    %v1761 = vpop.f32.mrf.mxu0
    %1762 = vdwg.mxu0
    %v1763 = vadd.f32 %v1711, %v1758
    %v1764 = vxor.u32 %v1763, 2147483648
    %v1765 = vmul.f32 %v1764, 1.442695
    %v1766 = vpow.pop %v1765
    %v1767 = vadd.f32 %v1766, 1.0
    %v1768 = vrcp.pop %v1767
    %v1769 = vmul.f32 1.0, %v1768
    %v1770 = vtanh.pop %v1763
    %v1771 = vmul.f32 %v1769, %v1662
    %1773 = vrot.lane.b32.xlu0 %v1770, 64
    %v1774 = vpop.permute.xlu0 %1773
    %v1776 = vmul.f32 %v1769, %v1774
    %1778 = vrot.lane.b32.xlu0 %v1776, 32
    %v1779 = vpop.permute.xlu0 %1778
    %v1781 = vadd.f32 %v1771, %v1779
    %v1782 = vtanh.pop %v1781
    %1784 = vrot.lane.b32.xlu0 %v1782, 64
    %v1785 = vpop.permute.xlu0 %1784
    %v1787 = vmul.f32 %v1769, %v1785
    %1789 = vrot.lane.b32.xlu0 %v1787, 32
    %v1790 = vpop.permute.xlu0 %1789
    %1792 = vst.msk [vmem:[%s7] sm:$0xff] %vm466, %v1790
    // Predicated region
    $region42: #{encoder_forward.1} parent=1 // pred_check
      _
    $region43: #{encoder_forward.1} parent=1 // pred_check_branch
      %1794 = sbr.rel (0) target = $region45
    $region44: #{encoder_forward.1} parent=1 // pred_region
      _
    $region45: #{encoder_forward.1} parent=1 // pred_fallthru
      _
    // Predicated region
    $region46: #{encoder_forward.1} parent=1 // pred_check
      _
    $region47: #{encoder_forward.1} parent=1 // pred_check_branch
      %1796 = sbr.rel (0) target = $region49
    $region48: #{encoder_forward.1} parent=1 // pred_region
      _
    $region49: #{encoder_forward.1} parent=1 // pred_fallthru
      _
    %1797 = vsyncpa [#allocation4], 1
    %1798 = vsyncpa [#allocation6], 1

</llo_original>
